<compile_context>
chip_gen: v7x
topology: tpu7x:2x2x1
jax: 0.10.0
libtpu: 0.0.40
codegen_flags: <defaults>
</compile_context>

<pallas_src>
import jax
import jax.numpy as jnp
from jax.experimental import pallas as pl
from jax.experimental.pallas import tpu as pltpu


def conv_relu_kernel(x_ref, w_ref, b_ref, o_ref, p_ref):
    """3x3 'same' conv + bias + ReLU for one batch element as one im2col matmul.

    x_ref: (1, H+2, W+2, Cin)   zero-padded NHWC input tile
    w_ref: (Cout, 9*Cin)        weights, flattened k = (kh*3 + kw)*Cin + ci
    b_ref: (Cout, 1)            bias column
    o_ref: (1, Cout, H*W)       lane-dense output (channel-major, HW flattened)
    p_ref: (H*W, 9*Cin) f32     VMEM scratch: im2col patch slab
    """
    Hp, Wp, Cin = x_ref.shape[1], x_ref.shape[2], x_ref.shape[3]
    H, W = Hp - 2, Wp - 2

    # Build the im2col slab once (static offsets, every lane written -> no zero init).
    for kh in range(3):
        for kw in range(3):
            t = kh * 3 + kw
            piece = x_ref[0, kh:kh + H, kw:kw + W, :].reshape(H * W, Cin)
            p_ref[:, t * Cin:(t + 1) * Cin] = piece.astype(p_ref.dtype)

    # ONE MXU matmul for all 9 taps: (Cout, K) x (H*W, K)^T -> (Cout, H*W).
    # (On v6e/v7x the operands could be cast to bf16 here with f32 accumulation;
    #  kept f32 so the 1e-4 reference check holds identically on all chips.)
    acc = jax.lax.dot_general(
        w_ref[...], p_ref[...],
        dimension_numbers=(((1,), (1,)), ((), ())),
        preferred_element_type=jnp.float32)

    acc = jnp.maximum(acc + b_ref[...], 0.0)          # bias + ReLU on dense vregs
    o_ref[0] = acc.astype(o_ref.dtype)


def upsample_block(x_nchw, weight_oihw, bias, upscale=2):
    """Pallas implementation of UpsampleBlock.forward.

    x_nchw      : (N, Cin, H, W)
    weight_oihw : (Cout*upscale**2, Cin, 3, 3)   (PyTorch Conv2d layout)
    bias        : (Cout*upscale**2,)
    returns     : (N, Cout, H*upscale, W*upscale)  (NCHW, like PyTorch)
    """
    N, Cin, H, W = x_nchw.shape
    Cout_total = weight_oihw.shape[0]
    r = upscale
    Cout = Cout_total // (r * r)
    K = 9 * Cin

    # Input glue: NCHW -> NHWC + 'same' halo pad (one tiny fused XLA pass; input is KB-sized).
    # TODO(synk): for large images fold the halo pad into the kernel (masked border loads)
    # and add an H-tile grid axis sized for v7x's 64 MiB VMEM.
    x_nhwc = jnp.transpose(x_nchw, (0, 2, 3, 1))
    x_pad = jnp.pad(x_nhwc, ((0, 0), (1, 1), (1, 1), (0, 0)))

    # Weights: OIHW -> (Cout_total, 9*Cin) with k = (kh*3 + kw)*Cin + ci,
    # matching the im2col slab ordering built inside the kernel.
    w_flat = jnp.transpose(weight_oihw, (0, 2, 3, 1)).reshape(Cout_total, K)
    b_col = bias.reshape(Cout_total, 1)

    y = pl.pallas_call(
        conv_relu_kernel,
        out_shape=jax.ShapeDtypeStruct((N, Cout_total, H * W), x_nchw.dtype),
        grid=(N,),
        in_specs=[
            pl.BlockSpec((1, H + 2, W + 2, Cin), lambda n: (n, 0, 0, 0)),
            pl.BlockSpec((Cout_total, K), lambda n: (0, 0)),
            pl.BlockSpec((Cout_total, 1), lambda n: (0, 0)),
        ],
        out_specs=pl.BlockSpec((1, Cout_total, H * W), lambda n: (n, 0, 0)),
        scratch_shapes=[pltpu.VMEM((H * W, K), jnp.float32)],
        compiler_params=pltpu.CompilerParams(dimension_semantics=("parallel",)),
    )(x_pad, w_flat, b_col)

    # PixelShuffle directly in NCHW (no NHWC->NCHW pass needed):
    # torch channel k = c*r^2 + i*r + j  ->  out[n, c, h*r + i, w*r + j]
    y = y.reshape(N, Cout, r, r, H, W)
    y = jnp.transpose(y, (0, 1, 4, 2, 5, 3))
    return y.reshape(N, Cout, H * r, W * r)


def _reference(x_nchw, weight_oihw, bias, upscale=2):
    """Pure-JAX reference mirroring PyTorch semantics (NCHW conv + pixel shuffle + relu)."""
    y = jax.lax.conv_general_dilated(
        x_nchw, weight_oihw, window_strides=(1, 1), padding=((1, 1), (1, 1)),
        dimension_numbers=("NCHW", "OIHW", "NCHW"))
    y = y + bias[None, :, None, None]
    N, C, H, W = y.shape
    r = upscale
    Cout = C // (r * r)
    y = y.reshape(N, Cout, r, r, H, W)
    y = jnp.transpose(y, (0, 1, 4, 2, 5, 3))
    y = y.reshape(N, Cout, H * r, W * r)
    return jnp.maximum(y, 0.0)


if __name__ == "__main__":
    # Deterministic parameter / input setup (synthetic weights, no checkpoint load).
    in_channels, out_channels, upscale = 4, 4, 2
    N, H, W = 2, 16, 16
    cout_total = out_channels * upscale ** 2

    key = jax.random.PRNGKey(0)
    kx, kw, kb = jax.random.split(key, 3)
    x = jax.random.normal(kx, (N, in_channels, H, W), dtype=jnp.float32)
    weight = 0.1 * jax.random.normal(kw, (cout_total, in_channels, 3, 3), dtype=jnp.float32)
    bias = 0.05 * jax.random.normal(kb, (cout_total,), dtype=jnp.float32)

    out = upsample_block(x, weight, bias, upscale)
    out = jax.block_until_ready(out)

    ref = jax.block_until_ready(_reference(x, weight, bias, upscale))
    assert out.shape == (N, out_channels, H * upscale, W * upscale), out.shape
    assert jnp.allclose(out, ref, atol=1e-4, rtol=1e-4), float(jnp.max(jnp.abs(out - ref)))

    print("KERNEL_OK")
</pallas_src>

<mosaic_0001>
module attributes {stable_mosaic.version = 11 : i64} {
  func.func @conv_relu_kernel(%arg0: i32, %arg1: memref<1x18x18x4xf32, #tpu.memory_space<vmem>>, %arg2: memref<16x36xf32, #tpu.memory_space<vmem>>, %arg3: memref<16x1xf32, #tpu.memory_space<vmem>>, %arg4: memref<1x16x256xf32, #tpu.memory_space<vmem>>, %arg5: memref<256x36xf32, #tpu.memory_space<vmem>>) attributes {dimension_semantics = [#tpu.dimension_semantics<parallel>], iteration_bounds = array<i64: 2>, scalar_prefetch = 0 : i64, scratch_operands = 1 : i64, tpu.core_type = #tpu.core_type<tc>, window_params = [{transform_indices = @transform_0, window_bounds = array<i64: 1, 18, 18, 4>}, {pipeline_mode = #tpu.pipeline_mode<synchronous>, transform_indices = @transform_1, window_bounds = array<i64: 16, 36>}, {pipeline_mode = #tpu.pipeline_mode<synchronous>, transform_indices = @transform_2, window_bounds = array<i64: 16, 1>}, {transform_indices = @transform_3, window_bounds = array<i64: 1, 16, 256>}]} {
    %c0 = arith.constant 0 : index
    %c0_0 = arith.constant 0 : index
    %c0_1 = arith.constant 0 : index
    %c0_2 = arith.constant 0 : index
    %0 = vector.load %arg1[%c0, %c0_0, %c0_1, %c0_2] : memref<1x18x18x4xf32, #tpu.memory_space<vmem>>, vector<1x16x16x4xf32>
    %1 = vector.shape_cast %0 : vector<1x16x16x4xf32> to vector<16x16x4xf32>
    %2 = vector.shape_cast %1 : vector<16x16x4xf32> to vector<256x4xf32>
    %c0_3 = arith.constant 0 : index
    %c0_4 = arith.constant 0 : index
    %3 = vector.load %arg5[%c0_3, %c0_4] : memref<256x36xf32, #tpu.memory_space<vmem>>, vector<256x4xf32>
    tpu.vector_store %arg5[%c0_3, %c0_4], %2 {strides = array<i32>} : memref<256x36xf32, #tpu.memory_space<vmem>>, vector<256x4xf32>,
    %c0_5 = arith.constant 0 : index
    %c0_6 = arith.constant 0 : index
    %c1 = arith.constant 1 : index
    %c0_7 = arith.constant 0 : index
    %4 = vector.load %arg1[%c0_5, %c0_6, %c1, %c0_7] : memref<1x18x18x4xf32, #tpu.memory_space<vmem>>, vector<1x16x16x4xf32>
    %5 = vector.shape_cast %4 : vector<1x16x16x4xf32> to vector<16x16x4xf32>
    %6 = vector.shape_cast %5 : vector<16x16x4xf32> to vector<256x4xf32>
    %c0_8 = arith.constant 0 : index
    %c4 = arith.constant 4 : index
    %7 = vector.load %arg5[%c0_8, %c4] : memref<256x36xf32, #tpu.memory_space<vmem>>, vector<256x4xf32>
    tpu.vector_store %arg5[%c0_8, %c4], %6 {strides = array<i32>} : memref<256x36xf32, #tpu.memory_space<vmem>>, vector<256x4xf32>,
    %c0_9 = arith.constant 0 : index
    %c0_10 = arith.constant 0 : index
    %c2 = arith.constant 2 : index
    %c0_11 = arith.constant 0 : index
    %8 = vector.load %arg1[%c0_9, %c0_10, %c2, %c0_11] : memref<1x18x18x4xf32, #tpu.memory_space<vmem>>, vector<1x16x16x4xf32>
    %9 = vector.shape_cast %8 : vector<1x16x16x4xf32> to vector<16x16x4xf32>
    %10 = vector.shape_cast %9 : vector<16x16x4xf32> to vector<256x4xf32>
    %c0_12 = arith.constant 0 : index
    %c8 = arith.constant 8 : index
    %11 = vector.load %arg5[%c0_12, %c8] : memref<256x36xf32, #tpu.memory_space<vmem>>, vector<256x4xf32>
    tpu.vector_store %arg5[%c0_12, %c8], %10 {strides = array<i32>} : memref<256x36xf32, #tpu.memory_space<vmem>>, vector<256x4xf32>,
    %c0_13 = arith.constant 0 : index
    %c1_14 = arith.constant 1 : index
    %c0_15 = arith.constant 0 : index
    %c0_16 = arith.constant 0 : index
    %12 = vector.load %arg1[%c0_13, %c1_14, %c0_15, %c0_16] : memref<1x18x18x4xf32, #tpu.memory_space<vmem>>, vector<1x16x16x4xf32>
    %13 = vector.shape_cast %12 : vector<1x16x16x4xf32> to vector<16x16x4xf32>
    %14 = vector.shape_cast %13 : vector<16x16x4xf32> to vector<256x4xf32>
    %c0_17 = arith.constant 0 : index
    %c12 = arith.constant 12 : index
    %15 = vector.load %arg5[%c0_17, %c12] : memref<256x36xf32, #tpu.memory_space<vmem>>, vector<256x4xf32>
    tpu.vector_store %arg5[%c0_17, %c12], %14 {strides = array<i32>} : memref<256x36xf32, #tpu.memory_space<vmem>>, vector<256x4xf32>,
    %c0_18 = arith.constant 0 : index
    %c1_19 = arith.constant 1 : index
    %c1_20 = arith.constant 1 : index
    %c0_21 = arith.constant 0 : index
    %16 = vector.load %arg1[%c0_18, %c1_19, %c1_20, %c0_21] : memref<1x18x18x4xf32, #tpu.memory_space<vmem>>, vector<1x16x16x4xf32>
    %17 = vector.shape_cast %16 : vector<1x16x16x4xf32> to vector<16x16x4xf32>
    %18 = vector.shape_cast %17 : vector<16x16x4xf32> to vector<256x4xf32>
    %c0_22 = arith.constant 0 : index
    %c16 = arith.constant 16 : index
    %19 = vector.load %arg5[%c0_22, %c16] : memref<256x36xf32, #tpu.memory_space<vmem>>, vector<256x4xf32>
    tpu.vector_store %arg5[%c0_22, %c16], %18 {strides = array<i32>} : memref<256x36xf32, #tpu.memory_space<vmem>>, vector<256x4xf32>,
    %c0_23 = arith.constant 0 : index
    %c1_24 = arith.constant 1 : index
    %c2_25 = arith.constant 2 : index
    %c0_26 = arith.constant 0 : index
    %20 = vector.load %arg1[%c0_23, %c1_24, %c2_25, %c0_26] : memref<1x18x18x4xf32, #tpu.memory_space<vmem>>, vector<1x16x16x4xf32>
    %21 = vector.shape_cast %20 : vector<1x16x16x4xf32> to vector<16x16x4xf32>
    %22 = vector.shape_cast %21 : vector<16x16x4xf32> to vector<256x4xf32>
    %c0_27 = arith.constant 0 : index
    %c20 = arith.constant 20 : index
    %23 = vector.load %arg5[%c0_27, %c20] : memref<256x36xf32, #tpu.memory_space<vmem>>, vector<256x4xf32>
    tpu.vector_store %arg5[%c0_27, %c20], %22 {strides = array<i32>} : memref<256x36xf32, #tpu.memory_space<vmem>>, vector<256x4xf32>,
    %c0_28 = arith.constant 0 : index
    %c2_29 = arith.constant 2 : index
    %c0_30 = arith.constant 0 : index
    %c0_31 = arith.constant 0 : index
    %24 = vector.load %arg1[%c0_28, %c2_29, %c0_30, %c0_31] : memref<1x18x18x4xf32, #tpu.memory_space<vmem>>, vector<1x16x16x4xf32>
    %25 = vector.shape_cast %24 : vector<1x16x16x4xf32> to vector<16x16x4xf32>
    %26 = vector.shape_cast %25 : vector<16x16x4xf32> to vector<256x4xf32>
    %c0_32 = arith.constant 0 : index
    %c24 = arith.constant 24 : index
    %27 = vector.load %arg5[%c0_32, %c24] : memref<256x36xf32, #tpu.memory_space<vmem>>, vector<256x4xf32>
    tpu.vector_store %arg5[%c0_32, %c24], %26 {strides = array<i32>} : memref<256x36xf32, #tpu.memory_space<vmem>>, vector<256x4xf32>,
    %c0_33 = arith.constant 0 : index
    %c2_34 = arith.constant 2 : index
    %c1_35 = arith.constant 1 : index
    %c0_36 = arith.constant 0 : index
    %28 = vector.load %arg1[%c0_33, %c2_34, %c1_35, %c0_36] : memref<1x18x18x4xf32, #tpu.memory_space<vmem>>, vector<1x16x16x4xf32>
    %29 = vector.shape_cast %28 : vector<1x16x16x4xf32> to vector<16x16x4xf32>
    %30 = vector.shape_cast %29 : vector<16x16x4xf32> to vector<256x4xf32>
    %c0_37 = arith.constant 0 : index
    %c28 = arith.constant 28 : index
    %31 = vector.load %arg5[%c0_37, %c28] : memref<256x36xf32, #tpu.memory_space<vmem>>, vector<256x4xf32>
    tpu.vector_store %arg5[%c0_37, %c28], %30 {strides = array<i32>} : memref<256x36xf32, #tpu.memory_space<vmem>>, vector<256x4xf32>,
    %c0_38 = arith.constant 0 : index
    %c2_39 = arith.constant 2 : index
    %c2_40 = arith.constant 2 : index
    %c0_41 = arith.constant 0 : index
    %32 = vector.load %arg1[%c0_38, %c2_39, %c2_40, %c0_41] : memref<1x18x18x4xf32, #tpu.memory_space<vmem>>, vector<1x16x16x4xf32>
    %33 = vector.shape_cast %32 : vector<1x16x16x4xf32> to vector<16x16x4xf32>
    %34 = vector.shape_cast %33 : vector<16x16x4xf32> to vector<256x4xf32>
    %c0_42 = arith.constant 0 : index
    %c32 = arith.constant 32 : index
    %35 = vector.load %arg5[%c0_42, %c32] : memref<256x36xf32, #tpu.memory_space<vmem>>, vector<256x4xf32>
    tpu.vector_store %arg5[%c0_42, %c32], %34 {strides = array<i32>} : memref<256x36xf32, #tpu.memory_space<vmem>>, vector<256x4xf32>,
    %c0_43 = arith.constant 0 : index
    %c0_44 = arith.constant 0 : index
    %36 = vector.load %arg2[%c0_43, %c0_44] : memref<16x36xf32, #tpu.memory_space<vmem>>, vector<16x36xf32>
    %c0_45 = arith.constant 0 : index
    %c0_46 = arith.constant 0 : index
    %37 = vector.load %arg5[%c0_45, %c0_46] : memref<256x36xf32, #tpu.memory_space<vmem>>, vector<256x36xf32>
    %cst = arith.constant dense<0.000000e+00> : vector<16x256xf32>
    %38 = tpu.matmul %36, %37, %cst {dimension_numbers = #tpu.dot_dimension_numbers<[1], [1], [0], [0], [0, 0, 1, 0], [], []>} : vector<16x36xf32>, vector<256x36xf32>, vector<16x256xf32> -> vector<16x256xf32>
    %c0_47 = arith.constant 0 : index
    %c0_48 = arith.constant 0 : index
    %39 = vector.load %arg3[%c0_47, %c0_48] : memref<16x1xf32, #tpu.memory_space<vmem>>, vector<16x1xf32>
    %40 = vector.broadcast %39 : vector<16x1xf32> to vector<16x256xf32>
    %41 = arith.addf %38, %40 : vector<16x256xf32>
    %cst_49 = arith.constant 0.000000e+00 : f32
    %42 = vector.broadcast %cst_49 : f32 to vector<16x256xf32>
    %43 = arith.maximumf %41, %42 : vector<16x256xf32>
    %c0_50 = arith.constant 0 : index
    %c0_51 = arith.constant 0 : index
    %c0_52 = arith.constant 0 : index
    %44 = vector.load %arg4[%c0_50, %c0_51, %c0_52] : memref<1x16x256xf32, #tpu.memory_space<vmem>>, vector<1x16x256xf32>
    %45 = vector.shape_cast %44 : vector<1x16x256xf32> to vector<16x256xf32>
    %46 = vector.shape_cast %43 : vector<16x256xf32> to vector<1x16x256xf32>
    tpu.vector_store %arg4[%c0_50, %c0_51, %c0_52], %46 {strides = array<i32>} : memref<1x16x256xf32, #tpu.memory_space<vmem>>, vector<1x16x256xf32>,
    return
  }
  func.func @transform_0(%arg0: i32) -> (i32, i32, i32, i32) {
    %c0_i32 = arith.constant 0 : i32
    %c0_i32_0 = arith.constant 0 : i32
    %c0_i32_1 = arith.constant 0 : i32
    %c0_i32_2 = arith.constant 0 : i32
    return %arg0, %c0_i32, %c0_i32_0, %c0_i32_1 : i32, i32, i32, i32
  }
  func.func @transform_1(%arg0: i32) -> (i32, i32) {
    %c0_i32 = arith.constant 0 : i32
    %c0_i32_0 = arith.constant 0 : i32
    %c0_i32_1 = arith.constant 0 : i32
    return %c0_i32, %c0_i32_0 : i32, i32
  }
  func.func @transform_2(%arg0: i32) -> (i32, i32) {
    %c0_i32 = arith.constant 0 : i32
    %c0_i32_0 = arith.constant 0 : i32
    %c0_i32_1 = arith.constant 0 : i32
    return %c0_i32, %c0_i32_0 : i32, i32
  }
  func.func @transform_3(%arg0: i32) -> (i32, i32, i32) {
    %c0_i32 = arith.constant 0 : i32
    %c0_i32_0 = arith.constant 0 : i32
    %c0_i32_1 = arith.constant 0 : i32
    return %arg0, %c0_i32, %c0_i32_0 : i32, i32, i32
  }
}

</mosaic_0001>

<llo_original>
// kernel: tpu_custom_call.1
$region0: #{tpu_custom_call.1}
  #allocation0 [shape = 'u32[]', space=smem, size = 0x4, offset = 0x4, fixed_abs, tag = 'smem constant byte address 0x4 - core index']
  #allocation1 [shape = 'u32[144,128]{1,0:T(1,128)}', space=vmem, size = 0x12000, scoped, tag = 'internal scratch']
  #allocation2 [shape = 'f32[256,36]{1,0:T(8,128)}', space=vmem, size = 0x20000, scoped, tag = 'scratch operand']
  %s0 = inlined_call_operand.vmem [shape: f32[2,18,18,4], index: 0, kind: input, shape index: {}]
  %s1 = inlined_call_operand.vmem [shape: f32[16,36], index: 1, kind: input, shape index: {}]
  %s2 = inlined_call_operand.vmem [shape: f32[16,1], index: 2, kind: input, shape index: {}]
  %s3 = inlined_call_operand.hbm [shape: f32[2,16,256], index: 3, kind: output, shape index: {}]
  %s4 = sld [smem:[#allocation0]]
  $region45: #{tpu_custom_call.1} parent=0
    _
  %s6 = ssub.s32 1, %s4
  %s7 = scalar_select 0, %s6, %s4
  $region1: #{tpu_custom_call.1} parent=0
    #allocation3 [shape = 'u8[32768]{0}', space=vmem, size = 0x8000, scoped, tag = 'output window, operand 0']
    #allocation4 [shape = 's32[2]{0}', space=sflag, size = 0x8, scoped, tag = 'scoped memory for tpu_custom_call.1']
    %8 = vsyncpa [#allocation4], 0
    %s9 = scalar_lea.sflag [#allocation4], 1
    %10 = vsyncpa %s9, 0
    loop: start=0, step=1, limit=4
    $region2: #{tpu_custom_call.1} parent=1 // loop_pre_header
      _
    $region3: #{tpu_custom_call.1} parent=1 // loop_header
      %s12 = sphi 0, %s16
      %p13 = scmp.ge.s32.totalorder %s12, 4
      %s22 = sphi 0, %s24
      %s25 = sphi 0, %s22
      %s26 = sphi 0, %s25
      %s42 = sphi 0, %s26
      %s46 = sphi 0, %s46
      %s48 = sphi 0, %s46
      %s49 = sphi 0, %s48
      %s63 = sphi 0, %s49
      %s67 = sphi 0, %s67
      %s69 = sphi 0, %s67
      %s70 = sphi 0, %s69
      %s84 = sphi 0, %s70
      %s90 = sphi 0, %s92
      %s93 = sphi 0, %s90
      %s94 = sphi 0, %s93
      %s110 = sphi 0, %s94
    $region4: #{tpu_custom_call.1} parent=1 // loop_header_branch
      %15 = sbr.rel (%p13) target = $region8
    $region5: #{tpu_custom_call.1} parent=1 // loop_body
      %s17 = ssub.s32 %s12, 1
      %s18 = ssub.s32 %s12, 2
      %s19 = sadd.s32 %s12, 1
      %s20 = ssub.s32 %s12, %s19
      %p21 = scmp.eq.s32.totalorder %s20, 0
      %s23 = sadd.s32 %s22, 1
      %s24 = scalar_select %p21, %s22, %s23
      %p27 = pneg %p21
      %p28 = scmp.eq.s32.totalorder %s12, 1
      %p29 = por %p27, %p28
      %p30 = scmp.ne.s32.totalorder %s22, %s25
      %p31 = scmp.eq.s32.totalorder %s12, 0
      %p32 = por %p30, %p31
      %p33 = scmp.ne.s32.totalorder %s22, %s25
      %p34 = scmp.eq.s32.totalorder %s17, 1
      %p35 = por %p33, %p34
      %p36 = scmp.ne.s32.totalorder %s25, %s26
      %p37 = scmp.eq.s32.totalorder %s17, 0
      %p38 = por %p36, %p37
      %p39 = scmp.ne.s32.totalorder %s25, %s26
      %p40 = scmp.eq.s32.totalorder %s18, 1
      %p41 = por %p39, %p40
      %p43 = scmp.ne.s32.totalorder %s26, %s42
      %p44 = scmp.eq.s32.totalorder %s18, 0
      %p45 = por %p43, %p44
      %s47 = sadd.s32 %s46, 1
      %p50 = scmp.eq.s32.totalorder %s12, 1
      %p51 = scmp.ne.s32.totalorder %s46, %s48
      %p52 = scmp.eq.s32.totalorder %s12, 0
      %p53 = por %p51, %p52
      %p54 = scmp.ne.s32.totalorder %s46, %s48
      %p55 = scmp.eq.s32.totalorder %s17, 1
      %p56 = por %p54, %p55
      %p57 = scmp.ne.s32.totalorder %s48, %s49
      %p58 = scmp.eq.s32.totalorder %s17, 0
      %p59 = por %p57, %p58
      %p60 = scmp.ne.s32.totalorder %s48, %s49
      %p61 = scmp.eq.s32.totalorder %s18, 1
      %p62 = por %p60, %p61
      %p64 = scmp.ne.s32.totalorder %s49, %s63
      %p65 = scmp.eq.s32.totalorder %s18, 0
      %p66 = por %p64, %p65
      %s68 = sadd.s32 %s67, 1
      %p71 = scmp.eq.s32.totalorder %s12, 1
      %p72 = scmp.ne.s32.totalorder %s67, %s69
      %p73 = scmp.eq.s32.totalorder %s12, 0
      %p74 = por %p72, %p73
      %p75 = scmp.ne.s32.totalorder %s67, %s69
      %p76 = scmp.eq.s32.totalorder %s17, 1
      %p77 = por %p75, %p76
      %p78 = scmp.ne.s32.totalorder %s69, %s70
      %p79 = scmp.eq.s32.totalorder %s17, 0
      %p80 = por %p78, %p79
      %p81 = scmp.ne.s32.totalorder %s69, %s70
      %p82 = scmp.eq.s32.totalorder %s18, 1
      %p83 = por %p81, %p82
      %p85 = scmp.ne.s32.totalorder %s70, %s84
      %p86 = scmp.eq.s32.totalorder %s18, 0
      %p87 = por %p85, %p86
      %s88 = ssub.s32 %s12, %s19
      %p89 = scmp.eq.s32.totalorder %s88, 0
      %s91 = sadd.s32 %s90, 1
      %s92 = scalar_select %p89, %s90, %s91
      %p95 = pneg %p89
      %p96 = scmp.eq.s32.totalorder %s12, 1
      %p97 = por %p95, %p96
      %p98 = scmp.ne.s32.totalorder %s90, %s93
      %p99 = scmp.eq.s32.totalorder %s12, 0
      %p100 = por %p98, %p99
      %p101 = scmp.ne.s32.totalorder %s90, %s93
      %p102 = scmp.eq.s32.totalorder %s17, 1
      %p103 = por %p101, %p102
      %p104 = scmp.ne.s32.totalorder %s93, %s94
      %p105 = scmp.eq.s32.totalorder %s17, 0
      %p106 = por %p104, %p105
      %p107 = scmp.ne.s32.totalorder %s93, %s94
      %p108 = scmp.eq.s32.totalorder %s18, 1
      %p109 = por %p107, %p108
      %p111 = scmp.ne.s32.totalorder %s94, %s110
      %p112 = scmp.eq.s32.totalorder %s18, 0
      %p113 = por %p111, %p112
      %p114 = scmp.le.s32.totalorder 1, %s12
      %p115 = scmp.lt.s32.totalorder %s12, 3
      %p116 = pnand %p114, %p115
      %p117 = pneg %p116
      // Predicated region
      $region9: #{tpu_custom_call.1} parent=5 // pred_check
        _
      $region10: #{tpu_custom_call.1} parent=5 // pred_check_branch
        %119 = sbr.rel (%p116) target = $region12
      $region11: #{tpu_custom_call.1} parent=5 // pred_region
        %s120 = ssub.s32 %s12, 1
        // Predicated region
        $region13: #{tpu_custom_call.1} parent=11 // pred_check
          %p121 = pneg %p59
        $region14: #{tpu_custom_call.1} parent=11 // pred_check_branch
          %123 = sbr.rel (%p121) target = $region16
        $region15: #{tpu_custom_call.1} parent=11 // pred_region
          _
        $region16: #{tpu_custom_call.1} parent=11 // pred_fallthru
          _
        // Predicated region
        $region17: #{tpu_custom_call.1} parent=11 // pred_check
          %p124 = pneg %p80
        $region18: #{tpu_custom_call.1} parent=11 // pred_check_branch
          %126 = sbr.rel (%p124) target = $region20
        $region19: #{tpu_custom_call.1} parent=11 // pred_region
          _
        $region20: #{tpu_custom_call.1} parent=11 // pred_fallthru
          _
      $region12: #{tpu_custom_call.1} parent=5 // pred_fallthru
        _
      %p127 = scmp.lt.s32.totalorder %s12, 2
      // Predicated region
      $region21: #{tpu_custom_call.1} parent=5 // pred_check
        %p128 = pneg %p127
      $region22: #{tpu_custom_call.1} parent=5 // pred_check_branch
        %130 = sbr.rel (%p128) target = $region24
      $region23: #{tpu_custom_call.1} parent=5 // pred_region
        // Predicated region
        $region25: #{tpu_custom_call.1} parent=23 // pred_check
          %p131 = pneg %p32
        $region26: #{tpu_custom_call.1} parent=23 // pred_check_branch
          %133 = sbr.rel (%p131) target = $region28
        $region27: #{tpu_custom_call.1} parent=23 // pred_region
          %p134 = scmp.lt.s32.totalorder %s12, 1
          %s135 = scalar_select %p134, %s12, 1
          %s136 = smul.addr %s135, 54
          %s137 = smul.addr %s136, 8
          %s138 = scalar_lea.vmem %s0, %s137
        $region28: #{tpu_custom_call.1} parent=23 // pred_fallthru
          _
      $region24: #{tpu_custom_call.1} parent=5 // pred_fallthru
        _
      %p139 = scmp.le.s32.totalorder 1, %s12
      %p140 = scmp.lt.s32.totalorder %s12, 3
      %p141 = pnand %p139, %p140
      %p142 = pneg %p141
      // Predicated region
      $region29: #{tpu_custom_call.1} parent=5 // pred_check
        _
      $region30: #{tpu_custom_call.1} parent=5 // pred_check_branch
        %144 = sbr.rel (%p141) target = $region32
      $region31: #{tpu_custom_call.1} parent=5 // pred_region
        %s145 = ssub.s32 %s12, 1
        %p146 = scmp.lt.s32.totalorder %s17, 1
        %s147 = scalar_select %p146, %s17, 1
        %s148 = smul.addr %s147, 54
        %s149 = smul.addr %s148, 8
        %s150 = scalar_lea.vmem %s0, %s149
        %p151 = pneg %p38
        %p152 = pneg %p35
        %p153 = pneg %p59
        %p154 = pneg %p56
        %p155 = pneg %p80
        %p156 = pneg %p77
        %p157 = pneg %p106
        %p158 = pneg %p103
        %s159 = sand.u32 %s93, 1
        %s160 = scalar_lea.sflag [#allocation4], %s159
        %s161 = sand.u32 %s93, 1
        %s162 = smul.addr %s161, 32
        %s163 = scalar_lea.vmem [#allocation3], %s162
        %p164 = scmp.lt.s32.totalorder %s17, 1
        %s165 = scalar_select %p164, %s17, 1
        %s166 = smul.addr %s165, 54
        %s167 = smul.addr %s166, 8
        %s168 = scalar_lea.vmem %s0, %s167
        %v169 = vld [vmem:[%s168] sm:$0xff]
        %v170 = vld [vmem:[%s168 + $0x8] sm:$0xff]
        %v171 = vld [vmem:[%s168 + $0x18] sm:$0xff]
        %v172 = vld [vmem:[%s168 + $0x20] sm:$0xff]
        %v173 = vld [vmem:[%s168 + $0x30] sm:$0xff]
        %v174 = vld [vmem:[%s168 + $0x38] sm:$0xff]
        %v175 = vld [vmem:[%s168 + $0x48] sm:$0xff]
        %v176 = vld [vmem:[%s168 + $0x50] sm:$0xff]
        %v177 = vld [vmem:[%s168 + $0x60] sm:$0xff]
        %v178 = vld [vmem:[%s168 + $0x68] sm:$0xff]
        %v179 = vld [vmem:[%s168 + $0x78] sm:$0xff]
        %v180 = vld [vmem:[%s168 + $0x80] sm:$0xff]
        %v181 = vld [vmem:[%s168 + $0x90] sm:$0xff]
        %v182 = vld [vmem:[%s168 + $0x98] sm:$0xff]
        %v183 = vld [vmem:[%s168 + $0xa8] sm:$0xff]
        %v184 = vld [vmem:[%s168 + $0xb0] sm:$0xff]
        %v185 = vld [vmem:[%s168 + $0xc0] sm:$0xff]
        %v186 = vld [vmem:[%s168 + $0xc8] sm:$0xff]
        %v187 = vld [vmem:[%s168 + $0xd8] sm:$0xff]
        %v188 = vld [vmem:[%s168 + $0xe0] sm:$0xff]
        %v189 = vld [vmem:[%s168 + $0xf0] sm:$0xff]
        %v190 = vld [vmem:[%s168 + $0xf8] sm:$0xff]
        %v191 = vld [vmem:[%s168 + $0x108] sm:$0xff]
        %v192 = vld [vmem:[%s168 + $0x110] sm:$0xff]
        %v193 = vld [vmem:[%s168 + $0x120] sm:$0xff]
        %v194 = vld [vmem:[%s168 + $0x128] sm:$0xff]
        %v195 = vld [vmem:[%s168 + $0x138] sm:$0xff]
        %v196 = vld [vmem:[%s168 + $0x140] sm:$0xff]
        %v197 = vld [vmem:[%s168 + $0x150] sm:$0xff]
        %v198 = vld [vmem:[%s168 + $0x158] sm:$0xff]
        %v199 = vld [vmem:[%s168 + $0x168] sm:$0xff]
        %v200 = vld [vmem:[%s168 + $0x170] sm:$0xff]
        %vm201 = vcmask 31744
        %202 = vst.msk [vmem:[#allocation2] sm:$0xff] %vm201, %v169
        %203 = vst.msk [vmem:[#allocation2 + $0x8] sm:$0xff] %vm201, %v170
        %204 = vst.msk [vmem:[#allocation2 + $0x10] sm:$0xff] %vm201, %v171
        %205 = vst.msk [vmem:[#allocation2 + $0x18] sm:$0xff] %vm201, %v172
        %206 = vst.msk [vmem:[#allocation2 + $0x20] sm:$0xff] %vm201, %v173
        %207 = vst.msk [vmem:[#allocation2 + $0x28] sm:$0xff] %vm201, %v174
        %208 = vst.msk [vmem:[#allocation2 + $0x30] sm:$0xff] %vm201, %v175
        %209 = vst.msk [vmem:[#allocation2 + $0x38] sm:$0xff] %vm201, %v176
        %210 = vst.msk [vmem:[#allocation2 + $0x40] sm:$0xff] %vm201, %v177
        %211 = vst.msk [vmem:[#allocation2 + $0x48] sm:$0xff] %vm201, %v178
        %212 = vst.msk [vmem:[#allocation2 + $0x50] sm:$0xff] %vm201, %v179
        %213 = vst.msk [vmem:[#allocation2 + $0x58] sm:$0xff] %vm201, %v180
        %214 = vst.msk [vmem:[#allocation2 + $0x60] sm:$0xff] %vm201, %v181
        %215 = vst.msk [vmem:[#allocation2 + $0x68] sm:$0xff] %vm201, %v182
        %216 = vst.msk [vmem:[#allocation2 + $0x70] sm:$0xff] %vm201, %v183
        %217 = vst.msk [vmem:[#allocation2 + $0x78] sm:$0xff] %vm201, %v184
        %218 = vst.msk [vmem:[#allocation2 + $0x80] sm:$0xff] %vm201, %v185
        %219 = vst.msk [vmem:[#allocation2 + $0x88] sm:$0xff] %vm201, %v186
        %220 = vst.msk [vmem:[#allocation2 + $0x90] sm:$0xff] %vm201, %v187
        %221 = vst.msk [vmem:[#allocation2 + $0x98] sm:$0xff] %vm201, %v188
        %222 = vst.msk [vmem:[#allocation2 + $0xa0] sm:$0xff] %vm201, %v189
        %223 = vst.msk [vmem:[#allocation2 + $0xa8] sm:$0xff] %vm201, %v190
        %224 = vst.msk [vmem:[#allocation2 + $0xb0] sm:$0xff] %vm201, %v191
        %225 = vst.msk [vmem:[#allocation2 + $0xb8] sm:$0xff] %vm201, %v192
        %226 = vst.msk [vmem:[#allocation2 + $0xc0] sm:$0xff] %vm201, %v193
        %227 = vst.msk [vmem:[#allocation2 + $0xc8] sm:$0xff] %vm201, %v194
        %228 = vst.msk [vmem:[#allocation2 + $0xd0] sm:$0xff] %vm201, %v195
        %229 = vst.msk [vmem:[#allocation2 + $0xd8] sm:$0xff] %vm201, %v196
        %230 = vst.msk [vmem:[#allocation2 + $0xe0] sm:$0xff] %vm201, %v197
        %231 = vst.msk [vmem:[#allocation2 + $0xe8] sm:$0xff] %vm201, %v198
        %232 = vst.msk [vmem:[#allocation2 + $0xf0] sm:$0xff] %vm201, %v199
        %233 = vst.msk [vmem:[#allocation2 + $0xf8] sm:$0xff] %vm201, %v200
        %v234 = vld [vmem:[%s168 + $0x1] sm:$0xff]
        %v235 = vld [vmem:[%s168 + $0x9] sm:$0xff]
        %v236 = vld [vmem:[%s168 + $0x19] sm:$0xff]
        %v237 = vld [vmem:[%s168 + $0x21] sm:$0xff]
        %v238 = vld [vmem:[%s168 + $0x31] sm:$0xff]
        %v239 = vld [vmem:[%s168 + $0x39] sm:$0xff]
        %v240 = vld [vmem:[%s168 + $0x49] sm:$0xff]
        %v241 = vld [vmem:[%s168 + $0x51] sm:$0xff]
        %v242 = vld [vmem:[%s168 + $0x61] sm:$0xff]
        %v243 = vld [vmem:[%s168 + $0x69] sm:$0xff]
        %v244 = vld [vmem:[%s168 + $0x79] sm:$0xff]
        %v245 = vld [vmem:[%s168 + $0x81] sm:$0xff]
        %v246 = vld [vmem:[%s168 + $0x91] sm:$0xff]
        %v247 = vld [vmem:[%s168 + $0x99] sm:$0xff]
        %v248 = vld [vmem:[%s168 + $0xa9] sm:$0xff]
        %v249 = vld [vmem:[%s168 + $0xb1] sm:$0xff]
        %v250 = vld [vmem:[%s168 + $0xc1] sm:$0xff]
        %v251 = vld [vmem:[%s168 + $0xc9] sm:$0xff]
        %v252 = vld [vmem:[%s168 + $0xd9] sm:$0xff]
        %v253 = vld [vmem:[%s168 + $0xe1] sm:$0xff]
        %v254 = vld [vmem:[%s168 + $0xf1] sm:$0xff]
        %v255 = vld [vmem:[%s168 + $0xf9] sm:$0xff]
        %v256 = vld [vmem:[%s168 + $0x109] sm:$0xff]
        %v257 = vld [vmem:[%s168 + $0x111] sm:$0xff]
        %v258 = vld [vmem:[%s168 + $0x121] sm:$0xff]
        %v259 = vld [vmem:[%s168 + $0x129] sm:$0xff]
        %v260 = vld [vmem:[%s168 + $0x139] sm:$0xff]
        %v261 = vld [vmem:[%s168 + $0x141] sm:$0xff]
        %v262 = vld [vmem:[%s168 + $0x151] sm:$0xff]
        %v263 = vld [vmem:[%s168 + $0x159] sm:$0xff]
        %v264 = vld [vmem:[%s168 + $0x169] sm:$0xff]
        %v265 = vld [vmem:[%s168 + $0x171] sm:$0xff]
        %298 = vrot.lane.b32.xlu0 %v234, 4
        %v299 = vpop.permute.xlu0 %298
        %300 = vrot.lane.b32.xlu0 %v235, 4
        %v301 = vpop.permute.xlu0 %300
        %302 = vrot.lane.b32.xlu0 %v236, 4
        %v303 = vpop.permute.xlu0 %302
        %304 = vrot.lane.b32.xlu0 %v237, 4
        %v305 = vpop.permute.xlu0 %304
        %306 = vrot.lane.b32.xlu0 %v238, 4
        %v307 = vpop.permute.xlu0 %306
        %308 = vrot.lane.b32.xlu0 %v239, 4
        %v309 = vpop.permute.xlu0 %308
        %310 = vrot.lane.b32.xlu0 %v240, 4
        %v311 = vpop.permute.xlu0 %310
        %312 = vrot.lane.b32.xlu0 %v241, 4
        %v313 = vpop.permute.xlu0 %312
        %314 = vrot.lane.b32.xlu0 %v242, 4
        %v315 = vpop.permute.xlu0 %314
        %316 = vrot.lane.b32.xlu0 %v243, 4
        %v317 = vpop.permute.xlu0 %316
        %318 = vrot.lane.b32.xlu0 %v244, 4
        %v319 = vpop.permute.xlu0 %318
        %320 = vrot.lane.b32.xlu0 %v245, 4
        %v321 = vpop.permute.xlu0 %320
        %322 = vrot.lane.b32.xlu0 %v246, 4
        %v323 = vpop.permute.xlu0 %322
        %324 = vrot.lane.b32.xlu0 %v247, 4
        %v325 = vpop.permute.xlu0 %324
        %326 = vrot.lane.b32.xlu0 %v248, 4
        %v327 = vpop.permute.xlu0 %326
        %328 = vrot.lane.b32.xlu0 %v249, 4
        %v329 = vpop.permute.xlu0 %328
        %330 = vrot.lane.b32.xlu0 %v250, 4
        %v331 = vpop.permute.xlu0 %330
        %332 = vrot.lane.b32.xlu0 %v251, 4
        %v333 = vpop.permute.xlu0 %332
        %334 = vrot.lane.b32.xlu0 %v252, 4
        %v335 = vpop.permute.xlu0 %334
        %336 = vrot.lane.b32.xlu0 %v253, 4
        %v337 = vpop.permute.xlu0 %336
        %338 = vrot.lane.b32.xlu0 %v254, 4
        %v339 = vpop.permute.xlu0 %338
        %340 = vrot.lane.b32.xlu0 %v255, 4
        %v341 = vpop.permute.xlu0 %340
        %342 = vrot.lane.b32.xlu0 %v256, 4
        %v343 = vpop.permute.xlu0 %342
        %344 = vrot.lane.b32.xlu0 %v257, 4
        %v345 = vpop.permute.xlu0 %344
        %346 = vrot.lane.b32.xlu0 %v258, 4
        %v347 = vpop.permute.xlu0 %346
        %348 = vrot.lane.b32.xlu0 %v259, 4
        %v349 = vpop.permute.xlu0 %348
        %350 = vrot.lane.b32.xlu0 %v260, 4
        %v351 = vpop.permute.xlu0 %350
        %352 = vrot.lane.b32.xlu0 %v261, 4
        %v353 = vpop.permute.xlu0 %352
        %354 = vrot.lane.b32.xlu0 %v262, 4
        %v355 = vpop.permute.xlu0 %354
        %356 = vrot.lane.b32.xlu0 %v263, 4
        %v357 = vpop.permute.xlu0 %356
        %358 = vrot.lane.b32.xlu0 %v264, 4
        %v359 = vpop.permute.xlu0 %358
        %360 = vrot.lane.b32.xlu0 %v265, 4
        %v361 = vpop.permute.xlu0 %360
        %vm394 = vcmask 64544
        %395 = vst.msk [vmem:[#allocation2] sm:$0xff] %vm394, %v299
        %396 = vst.msk [vmem:[#allocation2 + $0x8] sm:$0xff] %vm394, %v301
        %397 = vst.msk [vmem:[#allocation2 + $0x10] sm:$0xff] %vm394, %v303
        %398 = vst.msk [vmem:[#allocation2 + $0x18] sm:$0xff] %vm394, %v305
        %399 = vst.msk [vmem:[#allocation2 + $0x20] sm:$0xff] %vm394, %v307
        %400 = vst.msk [vmem:[#allocation2 + $0x28] sm:$0xff] %vm394, %v309
        %401 = vst.msk [vmem:[#allocation2 + $0x30] sm:$0xff] %vm394, %v311
        %402 = vst.msk [vmem:[#allocation2 + $0x38] sm:$0xff] %vm394, %v313
        %403 = vst.msk [vmem:[#allocation2 + $0x40] sm:$0xff] %vm394, %v315
        %404 = vst.msk [vmem:[#allocation2 + $0x48] sm:$0xff] %vm394, %v317
        %405 = vst.msk [vmem:[#allocation2 + $0x50] sm:$0xff] %vm394, %v319
        %406 = vst.msk [vmem:[#allocation2 + $0x58] sm:$0xff] %vm394, %v321
        %407 = vst.msk [vmem:[#allocation2 + $0x60] sm:$0xff] %vm394, %v323
        %408 = vst.msk [vmem:[#allocation2 + $0x68] sm:$0xff] %vm394, %v325
        %409 = vst.msk [vmem:[#allocation2 + $0x70] sm:$0xff] %vm394, %v327
        %410 = vst.msk [vmem:[#allocation2 + $0x78] sm:$0xff] %vm394, %v329
        %411 = vst.msk [vmem:[#allocation2 + $0x80] sm:$0xff] %vm394, %v331
        %412 = vst.msk [vmem:[#allocation2 + $0x88] sm:$0xff] %vm394, %v333
        %413 = vst.msk [vmem:[#allocation2 + $0x90] sm:$0xff] %vm394, %v335
        %414 = vst.msk [vmem:[#allocation2 + $0x98] sm:$0xff] %vm394, %v337
        %415 = vst.msk [vmem:[#allocation2 + $0xa0] sm:$0xff] %vm394, %v339
        %416 = vst.msk [vmem:[#allocation2 + $0xa8] sm:$0xff] %vm394, %v341
        %417 = vst.msk [vmem:[#allocation2 + $0xb0] sm:$0xff] %vm394, %v343
        %418 = vst.msk [vmem:[#allocation2 + $0xb8] sm:$0xff] %vm394, %v345
        %419 = vst.msk [vmem:[#allocation2 + $0xc0] sm:$0xff] %vm394, %v347
        %420 = vst.msk [vmem:[#allocation2 + $0xc8] sm:$0xff] %vm394, %v349
        %421 = vst.msk [vmem:[#allocation2 + $0xd0] sm:$0xff] %vm394, %v351
        %422 = vst.msk [vmem:[#allocation2 + $0xd8] sm:$0xff] %vm394, %v353
        %423 = vst.msk [vmem:[#allocation2 + $0xe0] sm:$0xff] %vm394, %v355
        %424 = vst.msk [vmem:[#allocation2 + $0xe8] sm:$0xff] %vm394, %v357
        %425 = vst.msk [vmem:[#allocation2 + $0xf0] sm:$0xff] %vm394, %v359
        %426 = vst.msk [vmem:[#allocation2 + $0xf8] sm:$0xff] %vm394, %v361
        %v427 = vld [vmem:[%s168 + $0x2] sm:$0xff]
        %v428 = vld [vmem:[%s168 + $0xa] sm:$0xff]
        %v429 = vld [vmem:[%s168 + $0x1a] sm:$0xff]
        %v430 = vld [vmem:[%s168 + $0x22] sm:$0xff]
        %v431 = vld [vmem:[%s168 + $0x32] sm:$0xff]
        %v432 = vld [vmem:[%s168 + $0x3a] sm:$0xff]
        %v433 = vld [vmem:[%s168 + $0x4a] sm:$0xff]
        %v434 = vld [vmem:[%s168 + $0x52] sm:$0xff]
        %v435 = vld [vmem:[%s168 + $0x62] sm:$0xff]
        %v436 = vld [vmem:[%s168 + $0x6a] sm:$0xff]
        %v437 = vld [vmem:[%s168 + $0x7a] sm:$0xff]
        %v438 = vld [vmem:[%s168 + $0x82] sm:$0xff]
        %v439 = vld [vmem:[%s168 + $0x92] sm:$0xff]
        %v440 = vld [vmem:[%s168 + $0x9a] sm:$0xff]
        %v441 = vld [vmem:[%s168 + $0xaa] sm:$0xff]
        %v442 = vld [vmem:[%s168 + $0xb2] sm:$0xff]
        %v443 = vld [vmem:[%s168 + $0xc2] sm:$0xff]
        %v444 = vld [vmem:[%s168 + $0xca] sm:$0xff]
        %v445 = vld [vmem:[%s168 + $0xda] sm:$0xff]
        %v446 = vld [vmem:[%s168 + $0xe2] sm:$0xff]
        %v447 = vld [vmem:[%s168 + $0xf2] sm:$0xff]
        %v448 = vld [vmem:[%s168 + $0xfa] sm:$0xff]
        %v449 = vld [vmem:[%s168 + $0x10a] sm:$0xff]
        %v450 = vld [vmem:[%s168 + $0x112] sm:$0xff]
        %v451 = vld [vmem:[%s168 + $0x122] sm:$0xff]
        %v452 = vld [vmem:[%s168 + $0x12a] sm:$0xff]
        %v453 = vld [vmem:[%s168 + $0x13a] sm:$0xff]
        %v454 = vld [vmem:[%s168 + $0x142] sm:$0xff]
        %v455 = vld [vmem:[%s168 + $0x152] sm:$0xff]
        %v456 = vld [vmem:[%s168 + $0x15a] sm:$0xff]
        %v457 = vld [vmem:[%s168 + $0x16a] sm:$0xff]
        %v458 = vld [vmem:[%s168 + $0x172] sm:$0xff]
        %491 = vrot.lane.b32.xlu0 %v427, 8
        %v492 = vpop.permute.xlu0 %491
        %493 = vrot.lane.b32.xlu0 %v428, 8
        %v494 = vpop.permute.xlu0 %493
        %495 = vrot.lane.b32.xlu0 %v429, 8
        %v496 = vpop.permute.xlu0 %495
        %497 = vrot.lane.b32.xlu0 %v430, 8
        %v498 = vpop.permute.xlu0 %497
        %499 = vrot.lane.b32.xlu0 %v431, 8
        %v500 = vpop.permute.xlu0 %499
        %501 = vrot.lane.b32.xlu0 %v432, 8
        %v502 = vpop.permute.xlu0 %501
        %503 = vrot.lane.b32.xlu0 %v433, 8
        %v504 = vpop.permute.xlu0 %503
        %505 = vrot.lane.b32.xlu0 %v434, 8
        %v506 = vpop.permute.xlu0 %505
        %507 = vrot.lane.b32.xlu0 %v435, 8
        %v508 = vpop.permute.xlu0 %507
        %509 = vrot.lane.b32.xlu0 %v436, 8
        %v510 = vpop.permute.xlu0 %509
        %511 = vrot.lane.b32.xlu0 %v437, 8
        %v512 = vpop.permute.xlu0 %511
        %513 = vrot.lane.b32.xlu0 %v438, 8
        %v514 = vpop.permute.xlu0 %513
        %515 = vrot.lane.b32.xlu0 %v439, 8
        %v516 = vpop.permute.xlu0 %515
        %517 = vrot.lane.b32.xlu0 %v440, 8
        %v518 = vpop.permute.xlu0 %517
        %519 = vrot.lane.b32.xlu0 %v441, 8
        %v520 = vpop.permute.xlu0 %519
        %521 = vrot.lane.b32.xlu0 %v442, 8
        %v522 = vpop.permute.xlu0 %521
        %523 = vrot.lane.b32.xlu0 %v443, 8
        %v524 = vpop.permute.xlu0 %523
        %525 = vrot.lane.b32.xlu0 %v444, 8
        %v526 = vpop.permute.xlu0 %525
        %527 = vrot.lane.b32.xlu0 %v445, 8
        %v528 = vpop.permute.xlu0 %527
        %529 = vrot.lane.b32.xlu0 %v446, 8
        %v530 = vpop.permute.xlu0 %529
        %531 = vrot.lane.b32.xlu0 %v447, 8
        %v532 = vpop.permute.xlu0 %531
        %533 = vrot.lane.b32.xlu0 %v448, 8
        %v534 = vpop.permute.xlu0 %533
        %535 = vrot.lane.b32.xlu0 %v449, 8
        %v536 = vpop.permute.xlu0 %535
        %537 = vrot.lane.b32.xlu0 %v450, 8
        %v538 = vpop.permute.xlu0 %537
        %539 = vrot.lane.b32.xlu0 %v451, 8
        %v540 = vpop.permute.xlu0 %539
        %541 = vrot.lane.b32.xlu0 %v452, 8
        %v542 = vpop.permute.xlu0 %541
        %543 = vrot.lane.b32.xlu0 %v453, 8
        %v544 = vpop.permute.xlu0 %543
        %545 = vrot.lane.b32.xlu0 %v454, 8
        %v546 = vpop.permute.xlu0 %545
        %547 = vrot.lane.b32.xlu0 %v455, 8
        %v548 = vpop.permute.xlu0 %547
        %549 = vrot.lane.b32.xlu0 %v456, 8
        %v550 = vpop.permute.xlu0 %549
        %551 = vrot.lane.b32.xlu0 %v457, 8
        %v552 = vpop.permute.xlu0 %551
        %553 = vrot.lane.b32.xlu0 %v458, 8
        %v554 = vpop.permute.xlu0 %553
        %vm587 = vcmask 97344
        %588 = vst.msk [vmem:[#allocation2] sm:$0xff] %vm587, %v492
        %589 = vst.msk [vmem:[#allocation2 + $0x8] sm:$0xff] %vm587, %v494
        %590 = vst.msk [vmem:[#allocation2 + $0x10] sm:$0xff] %vm587, %v496
        %591 = vst.msk [vmem:[#allocation2 + $0x18] sm:$0xff] %vm587, %v498
        %592 = vst.msk [vmem:[#allocation2 + $0x20] sm:$0xff] %vm587, %v500
        %593 = vst.msk [vmem:[#allocation2 + $0x28] sm:$0xff] %vm587, %v502
        %594 = vst.msk [vmem:[#allocation2 + $0x30] sm:$0xff] %vm587, %v504
        %595 = vst.msk [vmem:[#allocation2 + $0x38] sm:$0xff] %vm587, %v506
        %596 = vst.msk [vmem:[#allocation2 + $0x40] sm:$0xff] %vm587, %v508
        %597 = vst.msk [vmem:[#allocation2 + $0x48] sm:$0xff] %vm587, %v510
        %598 = vst.msk [vmem:[#allocation2 + $0x50] sm:$0xff] %vm587, %v512
        %599 = vst.msk [vmem:[#allocation2 + $0x58] sm:$0xff] %vm587, %v514
        %600 = vst.msk [vmem:[#allocation2 + $0x60] sm:$0xff] %vm587, %v516
        %601 = vst.msk [vmem:[#allocation2 + $0x68] sm:$0xff] %vm587, %v518
        %602 = vst.msk [vmem:[#allocation2 + $0x70] sm:$0xff] %vm587, %v520
        %603 = vst.msk [vmem:[#allocation2 + $0x78] sm:$0xff] %vm587, %v522
        %604 = vst.msk [vmem:[#allocation2 + $0x80] sm:$0xff] %vm587, %v524
        %605 = vst.msk [vmem:[#allocation2 + $0x88] sm:$0xff] %vm587, %v526
        %606 = vst.msk [vmem:[#allocation2 + $0x90] sm:$0xff] %vm587, %v528
        %607 = vst.msk [vmem:[#allocation2 + $0x98] sm:$0xff] %vm587, %v530
        %608 = vst.msk [vmem:[#allocation2 + $0xa0] sm:$0xff] %vm587, %v532
        %609 = vst.msk [vmem:[#allocation2 + $0xa8] sm:$0xff] %vm587, %v534
        %610 = vst.msk [vmem:[#allocation2 + $0xb0] sm:$0xff] %vm587, %v536
        %611 = vst.msk [vmem:[#allocation2 + $0xb8] sm:$0xff] %vm587, %v538
        %612 = vst.msk [vmem:[#allocation2 + $0xc0] sm:$0xff] %vm587, %v540
        %613 = vst.msk [vmem:[#allocation2 + $0xc8] sm:$0xff] %vm587, %v542
        %614 = vst.msk [vmem:[#allocation2 + $0xd0] sm:$0xff] %vm587, %v544
        %615 = vst.msk [vmem:[#allocation2 + $0xd8] sm:$0xff] %vm587, %v546
        %616 = vst.msk [vmem:[#allocation2 + $0xe0] sm:$0xff] %vm587, %v548
        %617 = vst.msk [vmem:[#allocation2 + $0xe8] sm:$0xff] %vm587, %v550
        %618 = vst.msk [vmem:[#allocation2 + $0xf0] sm:$0xff] %vm587, %v552
        %619 = vst.msk [vmem:[#allocation2 + $0xf8] sm:$0xff] %vm587, %v554
        %s620 = scalar_lea.vmem %s168, 24
        %v621 = vld [vmem:[%s620] sm:$0xff]
        %v622 = vld [vmem:[%s620 + $0x8] sm:$0xff]
        %v623 = vld [vmem:[%s620 + $0x18] sm:$0xff]
        %v624 = vld [vmem:[%s620 + $0x20] sm:$0xff]
        %v625 = vld [vmem:[%s620 + $0x30] sm:$0xff]
        %v626 = vld [vmem:[%s620 + $0x38] sm:$0xff]
        %v627 = vld [vmem:[%s620 + $0x48] sm:$0xff]
        %v628 = vld [vmem:[%s620 + $0x50] sm:$0xff]
        %v629 = vld [vmem:[%s620 + $0x60] sm:$0xff]
        %v630 = vld [vmem:[%s620 + $0x68] sm:$0xff]
        %v631 = vld [vmem:[%s620 + $0x78] sm:$0xff]
        %v632 = vld [vmem:[%s620 + $0x80] sm:$0xff]
        %v633 = vld [vmem:[%s620 + $0x90] sm:$0xff]
        %v634 = vld [vmem:[%s620 + $0x98] sm:$0xff]
        %v635 = vld [vmem:[%s620 + $0xa8] sm:$0xff]
        %v636 = vld [vmem:[%s620 + $0xb0] sm:$0xff]
        %v637 = vld [vmem:[%s620 + $0xc0] sm:$0xff]
        %v638 = vld [vmem:[%s620 + $0xc8] sm:$0xff]
        %v639 = vld [vmem:[%s620 + $0xd8] sm:$0xff]
        %v640 = vld [vmem:[%s620 + $0xe0] sm:$0xff]
        %v641 = vld [vmem:[%s620 + $0xf0] sm:$0xff]
        %v642 = vld [vmem:[%s620 + $0xf8] sm:$0xff]
        %v643 = vld [vmem:[%s620 + $0x108] sm:$0xff]
        %v644 = vld [vmem:[%s620 + $0x110] sm:$0xff]
        %v645 = vld [vmem:[%s620 + $0x120] sm:$0xff]
        %v646 = vld [vmem:[%s620 + $0x128] sm:$0xff]
        %v647 = vld [vmem:[%s620 + $0x138] sm:$0xff]
        %v648 = vld [vmem:[%s620 + $0x140] sm:$0xff]
        %v649 = vld [vmem:[%s620 + $0x150] sm:$0xff]
        %v650 = vld [vmem:[%s620 + $0x158] sm:$0xff]
        %v651 = vld [vmem:[%s620 + $0x168] sm:$0xff]
        %v652 = vld [vmem:[%s620 + $0x170] sm:$0xff]
        %685 = vrot.lane.b32.xlu0 %v621, 12
        %v686 = vpop.permute.xlu0 %685
        %687 = vrot.lane.b32.xlu0 %v622, 12
        %v688 = vpop.permute.xlu0 %687
        %689 = vrot.lane.b32.xlu0 %v623, 12
        %v690 = vpop.permute.xlu0 %689
        %691 = vrot.lane.b32.xlu0 %v624, 12
        %v692 = vpop.permute.xlu0 %691
        %693 = vrot.lane.b32.xlu0 %v625, 12
        %v694 = vpop.permute.xlu0 %693
        %695 = vrot.lane.b32.xlu0 %v626, 12
        %v696 = vpop.permute.xlu0 %695
        %697 = vrot.lane.b32.xlu0 %v627, 12
        %v698 = vpop.permute.xlu0 %697
        %699 = vrot.lane.b32.xlu0 %v628, 12
        %v700 = vpop.permute.xlu0 %699
        %701 = vrot.lane.b32.xlu0 %v629, 12
        %v702 = vpop.permute.xlu0 %701
        %703 = vrot.lane.b32.xlu0 %v630, 12
        %v704 = vpop.permute.xlu0 %703
        %705 = vrot.lane.b32.xlu0 %v631, 12
        %v706 = vpop.permute.xlu0 %705
        %707 = vrot.lane.b32.xlu0 %v632, 12
        %v708 = vpop.permute.xlu0 %707
        %709 = vrot.lane.b32.xlu0 %v633, 12
        %v710 = vpop.permute.xlu0 %709
        %711 = vrot.lane.b32.xlu0 %v634, 12
        %v712 = vpop.permute.xlu0 %711
        %713 = vrot.lane.b32.xlu0 %v635, 12
        %v714 = vpop.permute.xlu0 %713
        %715 = vrot.lane.b32.xlu0 %v636, 12
        %v716 = vpop.permute.xlu0 %715
        %717 = vrot.lane.b32.xlu0 %v637, 12
        %v718 = vpop.permute.xlu0 %717
        %719 = vrot.lane.b32.xlu0 %v638, 12
        %v720 = vpop.permute.xlu0 %719
        %721 = vrot.lane.b32.xlu0 %v639, 12
        %v722 = vpop.permute.xlu0 %721
        %723 = vrot.lane.b32.xlu0 %v640, 12
        %v724 = vpop.permute.xlu0 %723
        %725 = vrot.lane.b32.xlu0 %v641, 12
        %v726 = vpop.permute.xlu0 %725
        %727 = vrot.lane.b32.xlu0 %v642, 12
        %v728 = vpop.permute.xlu0 %727
        %729 = vrot.lane.b32.xlu0 %v643, 12
        %v730 = vpop.permute.xlu0 %729
        %731 = vrot.lane.b32.xlu0 %v644, 12
        %v732 = vpop.permute.xlu0 %731
        %733 = vrot.lane.b32.xlu0 %v645, 12
        %v734 = vpop.permute.xlu0 %733
        %735 = vrot.lane.b32.xlu0 %v646, 12
        %v736 = vpop.permute.xlu0 %735
        %737 = vrot.lane.b32.xlu0 %v647, 12
        %v738 = vpop.permute.xlu0 %737
        %739 = vrot.lane.b32.xlu0 %v648, 12
        %v740 = vpop.permute.xlu0 %739
        %741 = vrot.lane.b32.xlu0 %v649, 12
        %v742 = vpop.permute.xlu0 %741
        %743 = vrot.lane.b32.xlu0 %v650, 12
        %v744 = vpop.permute.xlu0 %743
        %745 = vrot.lane.b32.xlu0 %v651, 12
        %v746 = vpop.permute.xlu0 %745
        %747 = vrot.lane.b32.xlu0 %v652, 12
        %v748 = vpop.permute.xlu0 %747
        %vm781 = vcmask 130144
        %782 = vst.msk [vmem:[#allocation2] sm:$0xff] %vm781, %v686
        %783 = vst.msk [vmem:[#allocation2 + $0x8] sm:$0xff] %vm781, %v688
        %784 = vst.msk [vmem:[#allocation2 + $0x10] sm:$0xff] %vm781, %v690
        %785 = vst.msk [vmem:[#allocation2 + $0x18] sm:$0xff] %vm781, %v692
        %786 = vst.msk [vmem:[#allocation2 + $0x20] sm:$0xff] %vm781, %v694
        %787 = vst.msk [vmem:[#allocation2 + $0x28] sm:$0xff] %vm781, %v696
        %788 = vst.msk [vmem:[#allocation2 + $0x30] sm:$0xff] %vm781, %v698
        %789 = vst.msk [vmem:[#allocation2 + $0x38] sm:$0xff] %vm781, %v700
        %790 = vst.msk [vmem:[#allocation2 + $0x40] sm:$0xff] %vm781, %v702
        %791 = vst.msk [vmem:[#allocation2 + $0x48] sm:$0xff] %vm781, %v704
        %792 = vst.msk [vmem:[#allocation2 + $0x50] sm:$0xff] %vm781, %v706
        %793 = vst.msk [vmem:[#allocation2 + $0x58] sm:$0xff] %vm781, %v708
        %794 = vst.msk [vmem:[#allocation2 + $0x60] sm:$0xff] %vm781, %v710
        %795 = vst.msk [vmem:[#allocation2 + $0x68] sm:$0xff] %vm781, %v712
        %796 = vst.msk [vmem:[#allocation2 + $0x70] sm:$0xff] %vm781, %v714
        %797 = vst.msk [vmem:[#allocation2 + $0x78] sm:$0xff] %vm781, %v716
        %798 = vst.msk [vmem:[#allocation2 + $0x80] sm:$0xff] %vm781, %v718
        %799 = vst.msk [vmem:[#allocation2 + $0x88] sm:$0xff] %vm781, %v720
        %800 = vst.msk [vmem:[#allocation2 + $0x90] sm:$0xff] %vm781, %v722
        %801 = vst.msk [vmem:[#allocation2 + $0x98] sm:$0xff] %vm781, %v724
        %802 = vst.msk [vmem:[#allocation2 + $0xa0] sm:$0xff] %vm781, %v726
        %803 = vst.msk [vmem:[#allocation2 + $0xa8] sm:$0xff] %vm781, %v728
        %804 = vst.msk [vmem:[#allocation2 + $0xb0] sm:$0xff] %vm781, %v730
        %805 = vst.msk [vmem:[#allocation2 + $0xb8] sm:$0xff] %vm781, %v732
        %806 = vst.msk [vmem:[#allocation2 + $0xc0] sm:$0xff] %vm781, %v734
        %807 = vst.msk [vmem:[#allocation2 + $0xc8] sm:$0xff] %vm781, %v736
        %808 = vst.msk [vmem:[#allocation2 + $0xd0] sm:$0xff] %vm781, %v738
        %809 = vst.msk [vmem:[#allocation2 + $0xd8] sm:$0xff] %vm781, %v740
        %810 = vst.msk [vmem:[#allocation2 + $0xe0] sm:$0xff] %vm781, %v742
        %811 = vst.msk [vmem:[#allocation2 + $0xe8] sm:$0xff] %vm781, %v744
        %812 = vst.msk [vmem:[#allocation2 + $0xf0] sm:$0xff] %vm781, %v746
        %813 = vst.msk [vmem:[#allocation2 + $0xf8] sm:$0xff] %vm781, %v748
        %v814 = vld [vmem:[%s620 + $0x1] sm:$0xff]
        %v815 = vld [vmem:[%s620 + $0x9] sm:$0xff]
        %v816 = vld [vmem:[%s620 + $0x19] sm:$0xff]
        %v817 = vld [vmem:[%s620 + $0x21] sm:$0xff]
        %v818 = vld [vmem:[%s620 + $0x31] sm:$0xff]
        %v819 = vld [vmem:[%s620 + $0x39] sm:$0xff]
        %v820 = vld [vmem:[%s620 + $0x49] sm:$0xff]
        %v821 = vld [vmem:[%s620 + $0x51] sm:$0xff]
        %v822 = vld [vmem:[%s620 + $0x61] sm:$0xff]
        %v823 = vld [vmem:[%s620 + $0x69] sm:$0xff]
        %v824 = vld [vmem:[%s620 + $0x79] sm:$0xff]
        %v825 = vld [vmem:[%s620 + $0x81] sm:$0xff]
        %v826 = vld [vmem:[%s620 + $0x91] sm:$0xff]
        %v827 = vld [vmem:[%s620 + $0x99] sm:$0xff]
        %v828 = vld [vmem:[%s620 + $0xa9] sm:$0xff]
        %v829 = vld [vmem:[%s620 + $0xb1] sm:$0xff]
        %v830 = vld [vmem:[%s620 + $0xc1] sm:$0xff]
        %v831 = vld [vmem:[%s620 + $0xc9] sm:$0xff]
        %v832 = vld [vmem:[%s620 + $0xd9] sm:$0xff]
        %v833 = vld [vmem:[%s620 + $0xe1] sm:$0xff]
        %v834 = vld [vmem:[%s620 + $0xf1] sm:$0xff]
        %v835 = vld [vmem:[%s620 + $0xf9] sm:$0xff]
        %v836 = vld [vmem:[%s620 + $0x109] sm:$0xff]
        %v837 = vld [vmem:[%s620 + $0x111] sm:$0xff]
        %v838 = vld [vmem:[%s620 + $0x121] sm:$0xff]
        %v839 = vld [vmem:[%s620 + $0x129] sm:$0xff]
        %v840 = vld [vmem:[%s620 + $0x139] sm:$0xff]
        %v841 = vld [vmem:[%s620 + $0x141] sm:$0xff]
        %v842 = vld [vmem:[%s620 + $0x151] sm:$0xff]
        %v843 = vld [vmem:[%s620 + $0x159] sm:$0xff]
        %v844 = vld [vmem:[%s620 + $0x169] sm:$0xff]
        %v845 = vld [vmem:[%s620 + $0x171] sm:$0xff]
        %878 = vrot.lane.b32.xlu0 %v814, 16
        %v879 = vpop.permute.xlu0 %878
        %880 = vrot.lane.b32.xlu0 %v815, 16
        %v881 = vpop.permute.xlu0 %880
        %882 = vrot.lane.b32.xlu0 %v816, 16
        %v883 = vpop.permute.xlu0 %882
        %884 = vrot.lane.b32.xlu0 %v817, 16
        %v885 = vpop.permute.xlu0 %884
        %886 = vrot.lane.b32.xlu0 %v818, 16
        %v887 = vpop.permute.xlu0 %886
        %888 = vrot.lane.b32.xlu0 %v819, 16
        %v889 = vpop.permute.xlu0 %888
        %890 = vrot.lane.b32.xlu0 %v820, 16
        %v891 = vpop.permute.xlu0 %890
        %892 = vrot.lane.b32.xlu0 %v821, 16
        %v893 = vpop.permute.xlu0 %892
        %894 = vrot.lane.b32.xlu0 %v822, 16
        %v895 = vpop.permute.xlu0 %894
        %896 = vrot.lane.b32.xlu0 %v823, 16
        %v897 = vpop.permute.xlu0 %896
        %898 = vrot.lane.b32.xlu0 %v824, 16
        %v899 = vpop.permute.xlu0 %898
        %900 = vrot.lane.b32.xlu0 %v825, 16
        %v901 = vpop.permute.xlu0 %900
        %902 = vrot.lane.b32.xlu0 %v826, 16
        %v903 = vpop.permute.xlu0 %902
        %904 = vrot.lane.b32.xlu0 %v827, 16
        %v905 = vpop.permute.xlu0 %904
        %906 = vrot.lane.b32.xlu0 %v828, 16
        %v907 = vpop.permute.xlu0 %906
        %908 = vrot.lane.b32.xlu0 %v829, 16
        %v909 = vpop.permute.xlu0 %908
        %910 = vrot.lane.b32.xlu0 %v830, 16
        %v911 = vpop.permute.xlu0 %910
        %912 = vrot.lane.b32.xlu0 %v831, 16
        %v913 = vpop.permute.xlu0 %912
        %914 = vrot.lane.b32.xlu0 %v832, 16
        %v915 = vpop.permute.xlu0 %914
        %916 = vrot.lane.b32.xlu0 %v833, 16
        %v917 = vpop.permute.xlu0 %916
        %918 = vrot.lane.b32.xlu0 %v834, 16
        %v919 = vpop.permute.xlu0 %918
        %920 = vrot.lane.b32.xlu0 %v835, 16
        %v921 = vpop.permute.xlu0 %920
        %922 = vrot.lane.b32.xlu0 %v836, 16
        %v923 = vpop.permute.xlu0 %922
        %924 = vrot.lane.b32.xlu0 %v837, 16
        %v925 = vpop.permute.xlu0 %924
        %926 = vrot.lane.b32.xlu0 %v838, 16
        %v927 = vpop.permute.xlu0 %926
        %928 = vrot.lane.b32.xlu0 %v839, 16
        %v929 = vpop.permute.xlu0 %928
        %930 = vrot.lane.b32.xlu0 %v840, 16
        %v931 = vpop.permute.xlu0 %930
        %932 = vrot.lane.b32.xlu0 %v841, 16
        %v933 = vpop.permute.xlu0 %932
        %934 = vrot.lane.b32.xlu0 %v842, 16
        %v935 = vpop.permute.xlu0 %934
        %936 = vrot.lane.b32.xlu0 %v843, 16
        %v937 = vpop.permute.xlu0 %936
        %938 = vrot.lane.b32.xlu0 %v844, 16
        %v939 = vpop.permute.xlu0 %938
        %940 = vrot.lane.b32.xlu0 %v845, 16
        %v941 = vpop.permute.xlu0 %940
        %vm974 = vcmask 162944
        %975 = vst.msk [vmem:[#allocation2] sm:$0xff] %vm974, %v879
        %976 = vst.msk [vmem:[#allocation2 + $0x8] sm:$0xff] %vm974, %v881
        %977 = vst.msk [vmem:[#allocation2 + $0x10] sm:$0xff] %vm974, %v883
        %978 = vst.msk [vmem:[#allocation2 + $0x18] sm:$0xff] %vm974, %v885
        %979 = vst.msk [vmem:[#allocation2 + $0x20] sm:$0xff] %vm974, %v887
        %980 = vst.msk [vmem:[#allocation2 + $0x28] sm:$0xff] %vm974, %v889
        %981 = vst.msk [vmem:[#allocation2 + $0x30] sm:$0xff] %vm974, %v891
        %982 = vst.msk [vmem:[#allocation2 + $0x38] sm:$0xff] %vm974, %v893
        %983 = vst.msk [vmem:[#allocation2 + $0x40] sm:$0xff] %vm974, %v895
        %984 = vst.msk [vmem:[#allocation2 + $0x48] sm:$0xff] %vm974, %v897
        %985 = vst.msk [vmem:[#allocation2 + $0x50] sm:$0xff] %vm974, %v899
        %986 = vst.msk [vmem:[#allocation2 + $0x58] sm:$0xff] %vm974, %v901
        %987 = vst.msk [vmem:[#allocation2 + $0x60] sm:$0xff] %vm974, %v903
        %988 = vst.msk [vmem:[#allocation2 + $0x68] sm:$0xff] %vm974, %v905
        %989 = vst.msk [vmem:[#allocation2 + $0x70] sm:$0xff] %vm974, %v907
        %990 = vst.msk [vmem:[#allocation2 + $0x78] sm:$0xff] %vm974, %v909
        %991 = vst.msk [vmem:[#allocation2 + $0x80] sm:$0xff] %vm974, %v911
        %992 = vst.msk [vmem:[#allocation2 + $0x88] sm:$0xff] %vm974, %v913
        %993 = vst.msk [vmem:[#allocation2 + $0x90] sm:$0xff] %vm974, %v915
        %994 = vst.msk [vmem:[#allocation2 + $0x98] sm:$0xff] %vm974, %v917
        %995 = vst.msk [vmem:[#allocation2 + $0xa0] sm:$0xff] %vm974, %v919
        %996 = vst.msk [vmem:[#allocation2 + $0xa8] sm:$0xff] %vm974, %v921
        %997 = vst.msk [vmem:[#allocation2 + $0xb0] sm:$0xff] %vm974, %v923
        %998 = vst.msk [vmem:[#allocation2 + $0xb8] sm:$0xff] %vm974, %v925
        %999 = vst.msk [vmem:[#allocation2 + $0xc0] sm:$0xff] %vm974, %v927
        %1000 = vst.msk [vmem:[#allocation2 + $0xc8] sm:$0xff] %vm974, %v929
        %1001 = vst.msk [vmem:[#allocation2 + $0xd0] sm:$0xff] %vm974, %v931
        %1002 = vst.msk [vmem:[#allocation2 + $0xd8] sm:$0xff] %vm974, %v933
        %1003 = vst.msk [vmem:[#allocation2 + $0xe0] sm:$0xff] %vm974, %v935
        %1004 = vst.msk [vmem:[#allocation2 + $0xe8] sm:$0xff] %vm974, %v937
        %1005 = vst.msk [vmem:[#allocation2 + $0xf0] sm:$0xff] %vm974, %v939
        %1006 = vst.msk [vmem:[#allocation2 + $0xf8] sm:$0xff] %vm974, %v941
        %v1007 = vld [vmem:[%s620 + $0x2] sm:$0xff]
        %v1008 = vld [vmem:[%s620 + $0xa] sm:$0xff]
        %v1009 = vld [vmem:[%s620 + $0x1a] sm:$0xff]
        %v1010 = vld [vmem:[%s620 + $0x22] sm:$0xff]
        %v1011 = vld [vmem:[%s620 + $0x32] sm:$0xff]
        %v1012 = vld [vmem:[%s620 + $0x3a] sm:$0xff]
        %v1013 = vld [vmem:[%s620 + $0x4a] sm:$0xff]
        %v1014 = vld [vmem:[%s620 + $0x52] sm:$0xff]
        %v1015 = vld [vmem:[%s620 + $0x62] sm:$0xff]
        %v1016 = vld [vmem:[%s620 + $0x6a] sm:$0xff]
        %v1017 = vld [vmem:[%s620 + $0x7a] sm:$0xff]
        %v1018 = vld [vmem:[%s620 + $0x82] sm:$0xff]
        %v1019 = vld [vmem:[%s620 + $0x92] sm:$0xff]
        %v1020 = vld [vmem:[%s620 + $0x9a] sm:$0xff]
        %v1021 = vld [vmem:[%s620 + $0xaa] sm:$0xff]
        %v1022 = vld [vmem:[%s620 + $0xb2] sm:$0xff]
        %v1023 = vld [vmem:[%s620 + $0xc2] sm:$0xff]
        %v1024 = vld [vmem:[%s620 + $0xca] sm:$0xff]
        %v1025 = vld [vmem:[%s620 + $0xda] sm:$0xff]
        %v1026 = vld [vmem:[%s620 + $0xe2] sm:$0xff]
        %v1027 = vld [vmem:[%s620 + $0xf2] sm:$0xff]
        %v1028 = vld [vmem:[%s620 + $0xfa] sm:$0xff]
        %v1029 = vld [vmem:[%s620 + $0x10a] sm:$0xff]
        %v1030 = vld [vmem:[%s620 + $0x112] sm:$0xff]
        %v1031 = vld [vmem:[%s620 + $0x122] sm:$0xff]
        %v1032 = vld [vmem:[%s620 + $0x12a] sm:$0xff]
        %v1033 = vld [vmem:[%s620 + $0x13a] sm:$0xff]
        %v1034 = vld [vmem:[%s620 + $0x142] sm:$0xff]
        %v1035 = vld [vmem:[%s620 + $0x152] sm:$0xff]
        %v1036 = vld [vmem:[%s620 + $0x15a] sm:$0xff]
        %v1037 = vld [vmem:[%s620 + $0x16a] sm:$0xff]
        %v1038 = vld [vmem:[%s620 + $0x172] sm:$0xff]
        %1071 = vrot.lane.b32.xlu0 %v1007, 20
        %v1072 = vpop.permute.xlu0 %1071
        %1073 = vrot.lane.b32.xlu0 %v1008, 20
        %v1074 = vpop.permute.xlu0 %1073
        %1075 = vrot.lane.b32.xlu0 %v1009, 20
        %v1076 = vpop.permute.xlu0 %1075
        %1077 = vrot.lane.b32.xlu0 %v1010, 20
        %v1078 = vpop.permute.xlu0 %1077
        %1079 = vrot.lane.b32.xlu0 %v1011, 20
        %v1080 = vpop.permute.xlu0 %1079
        %1081 = vrot.lane.b32.xlu0 %v1012, 20
        %v1082 = vpop.permute.xlu0 %1081
        %1083 = vrot.lane.b32.xlu0 %v1013, 20
        %v1084 = vpop.permute.xlu0 %1083
        %1085 = vrot.lane.b32.xlu0 %v1014, 20
        %v1086 = vpop.permute.xlu0 %1085
        %1087 = vrot.lane.b32.xlu0 %v1015, 20
        %v1088 = vpop.permute.xlu0 %1087
        %1089 = vrot.lane.b32.xlu0 %v1016, 20
        %v1090 = vpop.permute.xlu0 %1089
        %1091 = vrot.lane.b32.xlu0 %v1017, 20
        %v1092 = vpop.permute.xlu0 %1091
        %1093 = vrot.lane.b32.xlu0 %v1018, 20
        %v1094 = vpop.permute.xlu0 %1093
        %1095 = vrot.lane.b32.xlu0 %v1019, 20
        %v1096 = vpop.permute.xlu0 %1095
        %1097 = vrot.lane.b32.xlu0 %v1020, 20
        %v1098 = vpop.permute.xlu0 %1097
        %1099 = vrot.lane.b32.xlu0 %v1021, 20
        %v1100 = vpop.permute.xlu0 %1099
        %1101 = vrot.lane.b32.xlu0 %v1022, 20
        %v1102 = vpop.permute.xlu0 %1101
        %1103 = vrot.lane.b32.xlu0 %v1023, 20
        %v1104 = vpop.permute.xlu0 %1103
        %1105 = vrot.lane.b32.xlu0 %v1024, 20
        %v1106 = vpop.permute.xlu0 %1105
        %1107 = vrot.lane.b32.xlu0 %v1025, 20
        %v1108 = vpop.permute.xlu0 %1107
        %1109 = vrot.lane.b32.xlu0 %v1026, 20
        %v1110 = vpop.permute.xlu0 %1109
        %1111 = vrot.lane.b32.xlu0 %v1027, 20
        %v1112 = vpop.permute.xlu0 %1111
        %1113 = vrot.lane.b32.xlu0 %v1028, 20
        %v1114 = vpop.permute.xlu0 %1113
        %1115 = vrot.lane.b32.xlu0 %v1029, 20
        %v1116 = vpop.permute.xlu0 %1115
        %1117 = vrot.lane.b32.xlu0 %v1030, 20
        %v1118 = vpop.permute.xlu0 %1117
        %1119 = vrot.lane.b32.xlu0 %v1031, 20
        %v1120 = vpop.permute.xlu0 %1119
        %1121 = vrot.lane.b32.xlu0 %v1032, 20
        %v1122 = vpop.permute.xlu0 %1121
        %1123 = vrot.lane.b32.xlu0 %v1033, 20
        %v1124 = vpop.permute.xlu0 %1123
        %1125 = vrot.lane.b32.xlu0 %v1034, 20
        %v1126 = vpop.permute.xlu0 %1125
        %1127 = vrot.lane.b32.xlu0 %v1035, 20
        %v1128 = vpop.permute.xlu0 %1127
        %1129 = vrot.lane.b32.xlu0 %v1036, 20
        %v1130 = vpop.permute.xlu0 %1129
        %1131 = vrot.lane.b32.xlu0 %v1037, 20
        %v1132 = vpop.permute.xlu0 %1131
        %1133 = vrot.lane.b32.xlu0 %v1038, 20
        %v1134 = vpop.permute.xlu0 %1133
        %vm1167 = vcmask 195744
        %1168 = vst.msk [vmem:[#allocation2] sm:$0xff] %vm1167, %v1072
        %1169 = vst.msk [vmem:[#allocation2 + $0x8] sm:$0xff] %vm1167, %v1074
        %1170 = vst.msk [vmem:[#allocation2 + $0x10] sm:$0xff] %vm1167, %v1076
        %1171 = vst.msk [vmem:[#allocation2 + $0x18] sm:$0xff] %vm1167, %v1078
        %1172 = vst.msk [vmem:[#allocation2 + $0x20] sm:$0xff] %vm1167, %v1080
        %1173 = vst.msk [vmem:[#allocation2 + $0x28] sm:$0xff] %vm1167, %v1082
        %1174 = vst.msk [vmem:[#allocation2 + $0x30] sm:$0xff] %vm1167, %v1084
        %1175 = vst.msk [vmem:[#allocation2 + $0x38] sm:$0xff] %vm1167, %v1086
        %1176 = vst.msk [vmem:[#allocation2 + $0x40] sm:$0xff] %vm1167, %v1088
        %1177 = vst.msk [vmem:[#allocation2 + $0x48] sm:$0xff] %vm1167, %v1090
        %1178 = vst.msk [vmem:[#allocation2 + $0x50] sm:$0xff] %vm1167, %v1092
        %1179 = vst.msk [vmem:[#allocation2 + $0x58] sm:$0xff] %vm1167, %v1094
        %1180 = vst.msk [vmem:[#allocation2 + $0x60] sm:$0xff] %vm1167, %v1096
        %1181 = vst.msk [vmem:[#allocation2 + $0x68] sm:$0xff] %vm1167, %v1098
        %1182 = vst.msk [vmem:[#allocation2 + $0x70] sm:$0xff] %vm1167, %v1100
        %1183 = vst.msk [vmem:[#allocation2 + $0x78] sm:$0xff] %vm1167, %v1102
        %1184 = vst.msk [vmem:[#allocation2 + $0x80] sm:$0xff] %vm1167, %v1104
        %1185 = vst.msk [vmem:[#allocation2 + $0x88] sm:$0xff] %vm1167, %v1106
        %1186 = vst.msk [vmem:[#allocation2 + $0x90] sm:$0xff] %vm1167, %v1108
        %1187 = vst.msk [vmem:[#allocation2 + $0x98] sm:$0xff] %vm1167, %v1110
        %1188 = vst.msk [vmem:[#allocation2 + $0xa0] sm:$0xff] %vm1167, %v1112
        %1189 = vst.msk [vmem:[#allocation2 + $0xa8] sm:$0xff] %vm1167, %v1114
        %1190 = vst.msk [vmem:[#allocation2 + $0xb0] sm:$0xff] %vm1167, %v1116
        %1191 = vst.msk [vmem:[#allocation2 + $0xb8] sm:$0xff] %vm1167, %v1118
        %1192 = vst.msk [vmem:[#allocation2 + $0xc0] sm:$0xff] %vm1167, %v1120
        %1193 = vst.msk [vmem:[#allocation2 + $0xc8] sm:$0xff] %vm1167, %v1122
        %1194 = vst.msk [vmem:[#allocation2 + $0xd0] sm:$0xff] %vm1167, %v1124
        %1195 = vst.msk [vmem:[#allocation2 + $0xd8] sm:$0xff] %vm1167, %v1126
        %1196 = vst.msk [vmem:[#allocation2 + $0xe0] sm:$0xff] %vm1167, %v1128
        %1197 = vst.msk [vmem:[#allocation2 + $0xe8] sm:$0xff] %vm1167, %v1130
        %1198 = vst.msk [vmem:[#allocation2 + $0xf0] sm:$0xff] %vm1167, %v1132
        %1199 = vst.msk [vmem:[#allocation2 + $0xf8] sm:$0xff] %vm1167, %v1134
        %s1200 = scalar_lea.vmem %s168, 48
        %v1201 = vld [vmem:[%s1200] sm:$0xff]
        %v1202 = vld [vmem:[%s1200 + $0x8] sm:$0xff]
        %v1203 = vld [vmem:[%s1200 + $0x18] sm:$0xff]
        %v1204 = vld [vmem:[%s1200 + $0x20] sm:$0xff]
        %v1205 = vld [vmem:[%s1200 + $0x30] sm:$0xff]
        %v1206 = vld [vmem:[%s1200 + $0x38] sm:$0xff]
        %v1207 = vld [vmem:[%s1200 + $0x48] sm:$0xff]
        %v1208 = vld [vmem:[%s1200 + $0x50] sm:$0xff]
        %v1209 = vld [vmem:[%s1200 + $0x60] sm:$0xff]
        %v1210 = vld [vmem:[%s1200 + $0x68] sm:$0xff]
        %v1211 = vld [vmem:[%s1200 + $0x78] sm:$0xff]
        %v1212 = vld [vmem:[%s1200 + $0x80] sm:$0xff]
        %v1213 = vld [vmem:[%s1200 + $0x90] sm:$0xff]
        %v1214 = vld [vmem:[%s1200 + $0x98] sm:$0xff]
        %v1215 = vld [vmem:[%s1200 + $0xa8] sm:$0xff]
        %v1216 = vld [vmem:[%s1200 + $0xb0] sm:$0xff]
        %v1217 = vld [vmem:[%s1200 + $0xc0] sm:$0xff]
        %v1218 = vld [vmem:[%s1200 + $0xc8] sm:$0xff]
        %v1219 = vld [vmem:[%s1200 + $0xd8] sm:$0xff]
        %v1220 = vld [vmem:[%s1200 + $0xe0] sm:$0xff]
        %v1221 = vld [vmem:[%s1200 + $0xf0] sm:$0xff]
        %v1222 = vld [vmem:[%s1200 + $0xf8] sm:$0xff]
        %v1223 = vld [vmem:[%s1200 + $0x108] sm:$0xff]
        %v1224 = vld [vmem:[%s1200 + $0x110] sm:$0xff]
        %v1225 = vld [vmem:[%s1200 + $0x120] sm:$0xff]
        %v1226 = vld [vmem:[%s1200 + $0x128] sm:$0xff]
        %v1227 = vld [vmem:[%s1200 + $0x138] sm:$0xff]
        %v1228 = vld [vmem:[%s1200 + $0x140] sm:$0xff]
        %v1229 = vld [vmem:[%s1200 + $0x150] sm:$0xff]
        %v1230 = vld [vmem:[%s1200 + $0x158] sm:$0xff]
        %v1231 = vld [vmem:[%s1200 + $0x168] sm:$0xff]
        %v1232 = vld [vmem:[%s1200 + $0x170] sm:$0xff]
        %1265 = vrot.lane.b32.xlu0 %v1201, 24
        %v1266 = vpop.permute.xlu0 %1265
        %1267 = vrot.lane.b32.xlu0 %v1202, 24
        %v1268 = vpop.permute.xlu0 %1267
        %1269 = vrot.lane.b32.xlu0 %v1203, 24
        %v1270 = vpop.permute.xlu0 %1269
        %1271 = vrot.lane.b32.xlu0 %v1204, 24
        %v1272 = vpop.permute.xlu0 %1271
        %1273 = vrot.lane.b32.xlu0 %v1205, 24
        %v1274 = vpop.permute.xlu0 %1273
        %1275 = vrot.lane.b32.xlu0 %v1206, 24
        %v1276 = vpop.permute.xlu0 %1275
        %1277 = vrot.lane.b32.xlu0 %v1207, 24
        %v1278 = vpop.permute.xlu0 %1277
        %1279 = vrot.lane.b32.xlu0 %v1208, 24
        %v1280 = vpop.permute.xlu0 %1279
        %1281 = vrot.lane.b32.xlu0 %v1209, 24
        %v1282 = vpop.permute.xlu0 %1281
        %1283 = vrot.lane.b32.xlu0 %v1210, 24
        %v1284 = vpop.permute.xlu0 %1283
        %1285 = vrot.lane.b32.xlu0 %v1211, 24
        %v1286 = vpop.permute.xlu0 %1285
        %1287 = vrot.lane.b32.xlu0 %v1212, 24
        %v1288 = vpop.permute.xlu0 %1287
        %1289 = vrot.lane.b32.xlu0 %v1213, 24
        %v1290 = vpop.permute.xlu0 %1289
        %1291 = vrot.lane.b32.xlu0 %v1214, 24
        %v1292 = vpop.permute.xlu0 %1291
        %1293 = vrot.lane.b32.xlu0 %v1215, 24
        %v1294 = vpop.permute.xlu0 %1293
        %1295 = vrot.lane.b32.xlu0 %v1216, 24
        %v1296 = vpop.permute.xlu0 %1295
        %1297 = vrot.lane.b32.xlu0 %v1217, 24
        %v1298 = vpop.permute.xlu0 %1297
        %1299 = vrot.lane.b32.xlu0 %v1218, 24
        %v1300 = vpop.permute.xlu0 %1299
        %1301 = vrot.lane.b32.xlu0 %v1219, 24
        %v1302 = vpop.permute.xlu0 %1301
        %1303 = vrot.lane.b32.xlu0 %v1220, 24
        %v1304 = vpop.permute.xlu0 %1303
        %1305 = vrot.lane.b32.xlu0 %v1221, 24
        %v1306 = vpop.permute.xlu0 %1305
        %1307 = vrot.lane.b32.xlu0 %v1222, 24
        %v1308 = vpop.permute.xlu0 %1307
        %1309 = vrot.lane.b32.xlu0 %v1223, 24
        %v1310 = vpop.permute.xlu0 %1309
        %1311 = vrot.lane.b32.xlu0 %v1224, 24
        %v1312 = vpop.permute.xlu0 %1311
        %1313 = vrot.lane.b32.xlu0 %v1225, 24
        %v1314 = vpop.permute.xlu0 %1313
        %1315 = vrot.lane.b32.xlu0 %v1226, 24
        %v1316 = vpop.permute.xlu0 %1315
        %1317 = vrot.lane.b32.xlu0 %v1227, 24
        %v1318 = vpop.permute.xlu0 %1317
        %1319 = vrot.lane.b32.xlu0 %v1228, 24
        %v1320 = vpop.permute.xlu0 %1319
        %1321 = vrot.lane.b32.xlu0 %v1229, 24
        %v1322 = vpop.permute.xlu0 %1321
        %1323 = vrot.lane.b32.xlu0 %v1230, 24
        %v1324 = vpop.permute.xlu0 %1323
        %1325 = vrot.lane.b32.xlu0 %v1231, 24
        %v1326 = vpop.permute.xlu0 %1325
        %1327 = vrot.lane.b32.xlu0 %v1232, 24
        %v1328 = vpop.permute.xlu0 %1327
        %vm1361 = vcmask 228544
        %1362 = vst.msk [vmem:[#allocation2] sm:$0xff] %vm1361, %v1266
        %1363 = vst.msk [vmem:[#allocation2 + $0x8] sm:$0xff] %vm1361, %v1268
        %1364 = vst.msk [vmem:[#allocation2 + $0x10] sm:$0xff] %vm1361, %v1270
        %1365 = vst.msk [vmem:[#allocation2 + $0x18] sm:$0xff] %vm1361, %v1272
        %1366 = vst.msk [vmem:[#allocation2 + $0x20] sm:$0xff] %vm1361, %v1274
        %1367 = vst.msk [vmem:[#allocation2 + $0x28] sm:$0xff] %vm1361, %v1276
        %1368 = vst.msk [vmem:[#allocation2 + $0x30] sm:$0xff] %vm1361, %v1278
        %1369 = vst.msk [vmem:[#allocation2 + $0x38] sm:$0xff] %vm1361, %v1280
        %1370 = vst.msk [vmem:[#allocation2 + $0x40] sm:$0xff] %vm1361, %v1282
        %1371 = vst.msk [vmem:[#allocation2 + $0x48] sm:$0xff] %vm1361, %v1284
        %1372 = vst.msk [vmem:[#allocation2 + $0x50] sm:$0xff] %vm1361, %v1286
        %1373 = vst.msk [vmem:[#allocation2 + $0x58] sm:$0xff] %vm1361, %v1288
        %1374 = vst.msk [vmem:[#allocation2 + $0x60] sm:$0xff] %vm1361, %v1290
        %1375 = vst.msk [vmem:[#allocation2 + $0x68] sm:$0xff] %vm1361, %v1292
        %1376 = vst.msk [vmem:[#allocation2 + $0x70] sm:$0xff] %vm1361, %v1294
        %1377 = vst.msk [vmem:[#allocation2 + $0x78] sm:$0xff] %vm1361, %v1296
        %1378 = vst.msk [vmem:[#allocation2 + $0x80] sm:$0xff] %vm1361, %v1298
        %1379 = vst.msk [vmem:[#allocation2 + $0x88] sm:$0xff] %vm1361, %v1300
        %1380 = vst.msk [vmem:[#allocation2 + $0x90] sm:$0xff] %vm1361, %v1302
        %1381 = vst.msk [vmem:[#allocation2 + $0x98] sm:$0xff] %vm1361, %v1304
        %1382 = vst.msk [vmem:[#allocation2 + $0xa0] sm:$0xff] %vm1361, %v1306
        %1383 = vst.msk [vmem:[#allocation2 + $0xa8] sm:$0xff] %vm1361, %v1308
        %1384 = vst.msk [vmem:[#allocation2 + $0xb0] sm:$0xff] %vm1361, %v1310
        %1385 = vst.msk [vmem:[#allocation2 + $0xb8] sm:$0xff] %vm1361, %v1312
        %1386 = vst.msk [vmem:[#allocation2 + $0xc0] sm:$0xff] %vm1361, %v1314
        %1387 = vst.msk [vmem:[#allocation2 + $0xc8] sm:$0xff] %vm1361, %v1316
        %1388 = vst.msk [vmem:[#allocation2 + $0xd0] sm:$0xff] %vm1361, %v1318
        %1389 = vst.msk [vmem:[#allocation2 + $0xd8] sm:$0xff] %vm1361, %v1320
        %1390 = vst.msk [vmem:[#allocation2 + $0xe0] sm:$0xff] %vm1361, %v1322
        %1391 = vst.msk [vmem:[#allocation2 + $0xe8] sm:$0xff] %vm1361, %v1324
        %1392 = vst.msk [vmem:[#allocation2 + $0xf0] sm:$0xff] %vm1361, %v1326
        %1393 = vst.msk [vmem:[#allocation2 + $0xf8] sm:$0xff] %vm1361, %v1328
        %v1394 = vld [vmem:[%s1200 + $0x1] sm:$0xff]
        %v1395 = vld [vmem:[%s1200 + $0x9] sm:$0xff]
        %v1396 = vld [vmem:[%s1200 + $0x19] sm:$0xff]
        %v1397 = vld [vmem:[%s1200 + $0x21] sm:$0xff]
        %v1398 = vld [vmem:[%s1200 + $0x31] sm:$0xff]
        %v1399 = vld [vmem:[%s1200 + $0x39] sm:$0xff]
        %v1400 = vld [vmem:[%s1200 + $0x49] sm:$0xff]
        %v1401 = vld [vmem:[%s1200 + $0x51] sm:$0xff]
        %v1402 = vld [vmem:[%s1200 + $0x61] sm:$0xff]
        %v1403 = vld [vmem:[%s1200 + $0x69] sm:$0xff]
        %v1404 = vld [vmem:[%s1200 + $0x79] sm:$0xff]
        %v1405 = vld [vmem:[%s1200 + $0x81] sm:$0xff]
        %v1406 = vld [vmem:[%s1200 + $0x91] sm:$0xff]
        %v1407 = vld [vmem:[%s1200 + $0x99] sm:$0xff]
        %v1408 = vld [vmem:[%s1200 + $0xa9] sm:$0xff]
        %v1409 = vld [vmem:[%s1200 + $0xb1] sm:$0xff]
        %v1410 = vld [vmem:[%s1200 + $0xc1] sm:$0xff]
        %v1411 = vld [vmem:[%s1200 + $0xc9] sm:$0xff]
        %v1412 = vld [vmem:[%s1200 + $0xd9] sm:$0xff]
        %v1413 = vld [vmem:[%s1200 + $0xe1] sm:$0xff]
        %v1414 = vld [vmem:[%s1200 + $0xf1] sm:$0xff]
        %v1415 = vld [vmem:[%s1200 + $0xf9] sm:$0xff]
        %v1416 = vld [vmem:[%s1200 + $0x109] sm:$0xff]
        %v1417 = vld [vmem:[%s1200 + $0x111] sm:$0xff]
        %v1418 = vld [vmem:[%s1200 + $0x121] sm:$0xff]
        %v1419 = vld [vmem:[%s1200 + $0x129] sm:$0xff]
        %v1420 = vld [vmem:[%s1200 + $0x139] sm:$0xff]
        %v1421 = vld [vmem:[%s1200 + $0x141] sm:$0xff]
        %v1422 = vld [vmem:[%s1200 + $0x151] sm:$0xff]
        %v1423 = vld [vmem:[%s1200 + $0x159] sm:$0xff]
        %v1424 = vld [vmem:[%s1200 + $0x169] sm:$0xff]
        %v1425 = vld [vmem:[%s1200 + $0x171] sm:$0xff]
        %1458 = vrot.lane.b32.xlu0 %v1394, 28
        %v1459 = vpop.permute.xlu0 %1458
        %1460 = vrot.lane.b32.xlu0 %v1395, 28
        %v1461 = vpop.permute.xlu0 %1460
        %1462 = vrot.lane.b32.xlu0 %v1396, 28
        %v1463 = vpop.permute.xlu0 %1462
        %1464 = vrot.lane.b32.xlu0 %v1397, 28
        %v1465 = vpop.permute.xlu0 %1464
        %1466 = vrot.lane.b32.xlu0 %v1398, 28
        %v1467 = vpop.permute.xlu0 %1466
        %1468 = vrot.lane.b32.xlu0 %v1399, 28
        %v1469 = vpop.permute.xlu0 %1468
        %1470 = vrot.lane.b32.xlu0 %v1400, 28
        %v1471 = vpop.permute.xlu0 %1470
        %1472 = vrot.lane.b32.xlu0 %v1401, 28
        %v1473 = vpop.permute.xlu0 %1472
        %1474 = vrot.lane.b32.xlu0 %v1402, 28
        %v1475 = vpop.permute.xlu0 %1474
        %1476 = vrot.lane.b32.xlu0 %v1403, 28
        %v1477 = vpop.permute.xlu0 %1476
        %1478 = vrot.lane.b32.xlu0 %v1404, 28
        %v1479 = vpop.permute.xlu0 %1478
        %1480 = vrot.lane.b32.xlu0 %v1405, 28
        %v1481 = vpop.permute.xlu0 %1480
        %1482 = vrot.lane.b32.xlu0 %v1406, 28
        %v1483 = vpop.permute.xlu0 %1482
        %1484 = vrot.lane.b32.xlu0 %v1407, 28
        %v1485 = vpop.permute.xlu0 %1484
        %1486 = vrot.lane.b32.xlu0 %v1408, 28
        %v1487 = vpop.permute.xlu0 %1486
        %1488 = vrot.lane.b32.xlu0 %v1409, 28
        %v1489 = vpop.permute.xlu0 %1488
        %1490 = vrot.lane.b32.xlu0 %v1410, 28
        %v1491 = vpop.permute.xlu0 %1490
        %1492 = vrot.lane.b32.xlu0 %v1411, 28
        %v1493 = vpop.permute.xlu0 %1492
        %1494 = vrot.lane.b32.xlu0 %v1412, 28
        %v1495 = vpop.permute.xlu0 %1494
        %1496 = vrot.lane.b32.xlu0 %v1413, 28
        %v1497 = vpop.permute.xlu0 %1496
        %1498 = vrot.lane.b32.xlu0 %v1414, 28
        %v1499 = vpop.permute.xlu0 %1498
        %1500 = vrot.lane.b32.xlu0 %v1415, 28
        %v1501 = vpop.permute.xlu0 %1500
        %1502 = vrot.lane.b32.xlu0 %v1416, 28
        %v1503 = vpop.permute.xlu0 %1502
        %1504 = vrot.lane.b32.xlu0 %v1417, 28
        %v1505 = vpop.permute.xlu0 %1504
        %1506 = vrot.lane.b32.xlu0 %v1418, 28
        %v1507 = vpop.permute.xlu0 %1506
        %1508 = vrot.lane.b32.xlu0 %v1419, 28
        %v1509 = vpop.permute.xlu0 %1508
        %1510 = vrot.lane.b32.xlu0 %v1420, 28
        %v1511 = vpop.permute.xlu0 %1510
        %1512 = vrot.lane.b32.xlu0 %v1421, 28
        %v1513 = vpop.permute.xlu0 %1512
        %1514 = vrot.lane.b32.xlu0 %v1422, 28
        %v1515 = vpop.permute.xlu0 %1514
        %1516 = vrot.lane.b32.xlu0 %v1423, 28
        %v1517 = vpop.permute.xlu0 %1516
        %1518 = vrot.lane.b32.xlu0 %v1424, 28
        %v1519 = vpop.permute.xlu0 %1518
        %1520 = vrot.lane.b32.xlu0 %v1425, 28
        %v1521 = vpop.permute.xlu0 %1520
        %vm1554 = vcmask 261344
        %1555 = vst.msk [vmem:[#allocation2] sm:$0xff] %vm1554, %v1459
        %1556 = vst.msk [vmem:[#allocation2 + $0x8] sm:$0xff] %vm1554, %v1461
        %1557 = vst.msk [vmem:[#allocation2 + $0x10] sm:$0xff] %vm1554, %v1463
        %1558 = vst.msk [vmem:[#allocation2 + $0x18] sm:$0xff] %vm1554, %v1465
        %1559 = vst.msk [vmem:[#allocation2 + $0x20] sm:$0xff] %vm1554, %v1467
        %1560 = vst.msk [vmem:[#allocation2 + $0x28] sm:$0xff] %vm1554, %v1469
        %1561 = vst.msk [vmem:[#allocation2 + $0x30] sm:$0xff] %vm1554, %v1471
        %1562 = vst.msk [vmem:[#allocation2 + $0x38] sm:$0xff] %vm1554, %v1473
        %1563 = vst.msk [vmem:[#allocation2 + $0x40] sm:$0xff] %vm1554, %v1475
        %1564 = vst.msk [vmem:[#allocation2 + $0x48] sm:$0xff] %vm1554, %v1477
        %1565 = vst.msk [vmem:[#allocation2 + $0x50] sm:$0xff] %vm1554, %v1479
        %1566 = vst.msk [vmem:[#allocation2 + $0x58] sm:$0xff] %vm1554, %v1481
        %1567 = vst.msk [vmem:[#allocation2 + $0x60] sm:$0xff] %vm1554, %v1483
        %1568 = vst.msk [vmem:[#allocation2 + $0x68] sm:$0xff] %vm1554, %v1485
        %1569 = vst.msk [vmem:[#allocation2 + $0x70] sm:$0xff] %vm1554, %v1487
        %1570 = vst.msk [vmem:[#allocation2 + $0x78] sm:$0xff] %vm1554, %v1489
        %1571 = vst.msk [vmem:[#allocation2 + $0x80] sm:$0xff] %vm1554, %v1491
        %1572 = vst.msk [vmem:[#allocation2 + $0x88] sm:$0xff] %vm1554, %v1493
        %1573 = vst.msk [vmem:[#allocation2 + $0x90] sm:$0xff] %vm1554, %v1495
        %1574 = vst.msk [vmem:[#allocation2 + $0x98] sm:$0xff] %vm1554, %v1497
        %1575 = vst.msk [vmem:[#allocation2 + $0xa0] sm:$0xff] %vm1554, %v1499
        %1576 = vst.msk [vmem:[#allocation2 + $0xa8] sm:$0xff] %vm1554, %v1501
        %1577 = vst.msk [vmem:[#allocation2 + $0xb0] sm:$0xff] %vm1554, %v1503
        %1578 = vst.msk [vmem:[#allocation2 + $0xb8] sm:$0xff] %vm1554, %v1505
        %1579 = vst.msk [vmem:[#allocation2 + $0xc0] sm:$0xff] %vm1554, %v1507
        %1580 = vst.msk [vmem:[#allocation2 + $0xc8] sm:$0xff] %vm1554, %v1509
        %1581 = vst.msk [vmem:[#allocation2 + $0xd0] sm:$0xff] %vm1554, %v1511
        %1582 = vst.msk [vmem:[#allocation2 + $0xd8] sm:$0xff] %vm1554, %v1513
        %1583 = vst.msk [vmem:[#allocation2 + $0xe0] sm:$0xff] %vm1554, %v1515
        %1584 = vst.msk [vmem:[#allocation2 + $0xe8] sm:$0xff] %vm1554, %v1517
        %1585 = vst.msk [vmem:[#allocation2 + $0xf0] sm:$0xff] %vm1554, %v1519
        %1586 = vst.msk [vmem:[#allocation2 + $0xf8] sm:$0xff] %vm1554, %v1521
        %v1587 = vld [vmem:[%s1200 + $0x2] sm:$0xff]
        %v1588 = vld [vmem:[%s1200 + $0xa] sm:$0xff]
        %v1589 = vld [vmem:[%s1200 + $0x1a] sm:$0xff]
        %v1590 = vld [vmem:[%s1200 + $0x22] sm:$0xff]
        %v1591 = vld [vmem:[%s1200 + $0x32] sm:$0xff]
        %v1592 = vld [vmem:[%s1200 + $0x3a] sm:$0xff]
        %v1593 = vld [vmem:[%s1200 + $0x4a] sm:$0xff]
        %v1594 = vld [vmem:[%s1200 + $0x52] sm:$0xff]
        %v1595 = vld [vmem:[%s1200 + $0x62] sm:$0xff]
        %v1596 = vld [vmem:[%s1200 + $0x6a] sm:$0xff]
        %v1597 = vld [vmem:[%s1200 + $0x7a] sm:$0xff]
        %v1598 = vld [vmem:[%s1200 + $0x82] sm:$0xff]
        %v1599 = vld [vmem:[%s1200 + $0x92] sm:$0xff]
        %v1600 = vld [vmem:[%s1200 + $0x9a] sm:$0xff]
        %v1601 = vld [vmem:[%s1200 + $0xaa] sm:$0xff]
        %v1602 = vld [vmem:[%s1200 + $0xb2] sm:$0xff]
        %v1603 = vld [vmem:[%s1200 + $0xc2] sm:$0xff]
        %v1604 = vld [vmem:[%s1200 + $0xca] sm:$0xff]
        %v1605 = vld [vmem:[%s1200 + $0xda] sm:$0xff]
        %v1606 = vld [vmem:[%s1200 + $0xe2] sm:$0xff]
        %v1607 = vld [vmem:[%s1200 + $0xf2] sm:$0xff]
        %v1608 = vld [vmem:[%s1200 + $0xfa] sm:$0xff]
        %v1609 = vld [vmem:[%s1200 + $0x10a] sm:$0xff]
        %v1610 = vld [vmem:[%s1200 + $0x112] sm:$0xff]
        %v1611 = vld [vmem:[%s1200 + $0x122] sm:$0xff]
        %v1612 = vld [vmem:[%s1200 + $0x12a] sm:$0xff]
        %v1613 = vld [vmem:[%s1200 + $0x13a] sm:$0xff]
        %v1614 = vld [vmem:[%s1200 + $0x142] sm:$0xff]
        %v1615 = vld [vmem:[%s1200 + $0x152] sm:$0xff]
        %v1616 = vld [vmem:[%s1200 + $0x15a] sm:$0xff]
        %v1617 = vld [vmem:[%s1200 + $0x16a] sm:$0xff]
        %v1618 = vld [vmem:[%s1200 + $0x172] sm:$0xff]
        %1651 = vrot.lane.b32.xlu0 %v1587, 32
        %v1652 = vpop.permute.xlu0 %1651
        %1653 = vrot.lane.b32.xlu0 %v1588, 32
        %v1654 = vpop.permute.xlu0 %1653
        %1655 = vrot.lane.b32.xlu0 %v1589, 32
        %v1656 = vpop.permute.xlu0 %1655
        %1657 = vrot.lane.b32.xlu0 %v1590, 32
        %v1658 = vpop.permute.xlu0 %1657
        %1659 = vrot.lane.b32.xlu0 %v1591, 32
        %v1660 = vpop.permute.xlu0 %1659
        %1661 = vrot.lane.b32.xlu0 %v1592, 32
        %v1662 = vpop.permute.xlu0 %1661
        %1663 = vrot.lane.b32.xlu0 %v1593, 32
        %v1664 = vpop.permute.xlu0 %1663
        %1665 = vrot.lane.b32.xlu0 %v1594, 32
        %v1666 = vpop.permute.xlu0 %1665
        %1667 = vrot.lane.b32.xlu0 %v1595, 32
        %v1668 = vpop.permute.xlu0 %1667
        %1669 = vrot.lane.b32.xlu0 %v1596, 32
        %v1670 = vpop.permute.xlu0 %1669
        %1671 = vrot.lane.b32.xlu0 %v1597, 32
        %v1672 = vpop.permute.xlu0 %1671
        %1673 = vrot.lane.b32.xlu0 %v1598, 32
        %v1674 = vpop.permute.xlu0 %1673
        %1675 = vrot.lane.b32.xlu0 %v1599, 32
        %v1676 = vpop.permute.xlu0 %1675
        %1677 = vrot.lane.b32.xlu0 %v1600, 32
        %v1678 = vpop.permute.xlu0 %1677
        %1679 = vrot.lane.b32.xlu0 %v1601, 32
        %v1680 = vpop.permute.xlu0 %1679
        %1681 = vrot.lane.b32.xlu0 %v1602, 32
        %v1682 = vpop.permute.xlu0 %1681
        %1683 = vrot.lane.b32.xlu0 %v1603, 32
        %v1684 = vpop.permute.xlu0 %1683
        %1685 = vrot.lane.b32.xlu0 %v1604, 32
        %v1686 = vpop.permute.xlu0 %1685
        %1687 = vrot.lane.b32.xlu0 %v1605, 32
        %v1688 = vpop.permute.xlu0 %1687
        %1689 = vrot.lane.b32.xlu0 %v1606, 32
        %v1690 = vpop.permute.xlu0 %1689
        %1691 = vrot.lane.b32.xlu0 %v1607, 32
        %v1692 = vpop.permute.xlu0 %1691
        %1693 = vrot.lane.b32.xlu0 %v1608, 32
        %v1694 = vpop.permute.xlu0 %1693
        %1695 = vrot.lane.b32.xlu0 %v1609, 32
        %v1696 = vpop.permute.xlu0 %1695
        %1697 = vrot.lane.b32.xlu0 %v1610, 32
        %v1698 = vpop.permute.xlu0 %1697
        %1699 = vrot.lane.b32.xlu0 %v1611, 32
        %v1700 = vpop.permute.xlu0 %1699
        %1701 = vrot.lane.b32.xlu0 %v1612, 32
        %v1702 = vpop.permute.xlu0 %1701
        %1703 = vrot.lane.b32.xlu0 %v1613, 32
        %v1704 = vpop.permute.xlu0 %1703
        %1705 = vrot.lane.b32.xlu0 %v1614, 32
        %v1706 = vpop.permute.xlu0 %1705
        %1707 = vrot.lane.b32.xlu0 %v1615, 32
        %v1708 = vpop.permute.xlu0 %1707
        %1709 = vrot.lane.b32.xlu0 %v1616, 32
        %v1710 = vpop.permute.xlu0 %1709
        %1711 = vrot.lane.b32.xlu0 %v1617, 32
        %v1712 = vpop.permute.xlu0 %1711
        %1713 = vrot.lane.b32.xlu0 %v1618, 32
        %v1714 = vpop.permute.xlu0 %1713
        %vm1747 = vcmask 294144
        %1748 = vst.msk [vmem:[#allocation2] sm:$0xff] %vm1747, %v1652
        %1749 = vst.msk [vmem:[#allocation2 + $0x8] sm:$0xff] %vm1747, %v1654
        %1750 = vst.msk [vmem:[#allocation2 + $0x10] sm:$0xff] %vm1747, %v1656
        %1751 = vst.msk [vmem:[#allocation2 + $0x18] sm:$0xff] %vm1747, %v1658
        %1752 = vst.msk [vmem:[#allocation2 + $0x20] sm:$0xff] %vm1747, %v1660
        %1753 = vst.msk [vmem:[#allocation2 + $0x28] sm:$0xff] %vm1747, %v1662
        %1754 = vst.msk [vmem:[#allocation2 + $0x30] sm:$0xff] %vm1747, %v1664
        %1755 = vst.msk [vmem:[#allocation2 + $0x38] sm:$0xff] %vm1747, %v1666
        %1756 = vst.msk [vmem:[#allocation2 + $0x40] sm:$0xff] %vm1747, %v1668
        %1757 = vst.msk [vmem:[#allocation2 + $0x48] sm:$0xff] %vm1747, %v1670
        %1758 = vst.msk [vmem:[#allocation2 + $0x50] sm:$0xff] %vm1747, %v1672
        %1759 = vst.msk [vmem:[#allocation2 + $0x58] sm:$0xff] %vm1747, %v1674
        %1760 = vst.msk [vmem:[#allocation2 + $0x60] sm:$0xff] %vm1747, %v1676
        %1761 = vst.msk [vmem:[#allocation2 + $0x68] sm:$0xff] %vm1747, %v1678
        %1762 = vst.msk [vmem:[#allocation2 + $0x70] sm:$0xff] %vm1747, %v1680
        %1763 = vst.msk [vmem:[#allocation2 + $0x78] sm:$0xff] %vm1747, %v1682
        %1764 = vst.msk [vmem:[#allocation2 + $0x80] sm:$0xff] %vm1747, %v1684
        %1765 = vst.msk [vmem:[#allocation2 + $0x88] sm:$0xff] %vm1747, %v1686
        %1766 = vst.msk [vmem:[#allocation2 + $0x90] sm:$0xff] %vm1747, %v1688
        %1767 = vst.msk [vmem:[#allocation2 + $0x98] sm:$0xff] %vm1747, %v1690
        %1768 = vst.msk [vmem:[#allocation2 + $0xa0] sm:$0xff] %vm1747, %v1692
        %1769 = vst.msk [vmem:[#allocation2 + $0xa8] sm:$0xff] %vm1747, %v1694
        %1770 = vst.msk [vmem:[#allocation2 + $0xb0] sm:$0xff] %vm1747, %v1696
        %1771 = vst.msk [vmem:[#allocation2 + $0xb8] sm:$0xff] %vm1747, %v1698
        %1772 = vst.msk [vmem:[#allocation2 + $0xc0] sm:$0xff] %vm1747, %v1700
        %1773 = vst.msk [vmem:[#allocation2 + $0xc8] sm:$0xff] %vm1747, %v1702
        %1774 = vst.msk [vmem:[#allocation2 + $0xd0] sm:$0xff] %vm1747, %v1704
        %1775 = vst.msk [vmem:[#allocation2 + $0xd8] sm:$0xff] %vm1747, %v1706
        %1776 = vst.msk [vmem:[#allocation2 + $0xe0] sm:$0xff] %vm1747, %v1708
        %1777 = vst.msk [vmem:[#allocation2 + $0xe8] sm:$0xff] %vm1747, %v1710
        %1778 = vst.msk [vmem:[#allocation2 + $0xf0] sm:$0xff] %vm1747, %v1712
        %1779 = vst.msk [vmem:[#allocation2 + $0xf8] sm:$0xff] %vm1747, %v1714
        %v1780 = vld [vmem:[%s1] sm:$0xff]
        %v1781 = vld [vmem:[%s1 + $0x8] sm:$0xff]
        %v1782 = vld [vmem:[#allocation2] sm:$0xff]
        %v1783 = vld [vmem:[#allocation2 + $0x8] sm:$0xff]
        %v1784 = vld [vmem:[#allocation2 + $0x10] sm:$0xff]
        %v1785 = vld [vmem:[#allocation2 + $0x18] sm:$0xff]
        %v1786 = vld [vmem:[#allocation2 + $0x20] sm:$0xff]
        %v1787 = vld [vmem:[#allocation2 + $0x28] sm:$0xff]
        %v1788 = vld [vmem:[#allocation2 + $0x30] sm:$0xff]
        %v1789 = vld [vmem:[#allocation2 + $0x38] sm:$0xff]
        %v1790 = vld [vmem:[#allocation2 + $0x40] sm:$0xff]
        %v1791 = vld [vmem:[#allocation2 + $0x48] sm:$0xff]
        %v1792 = vld [vmem:[#allocation2 + $0x50] sm:$0xff]
        %v1793 = vld [vmem:[#allocation2 + $0x58] sm:$0xff]
        %v1794 = vld [vmem:[#allocation2 + $0x60] sm:$0xff]
        %v1795 = vld [vmem:[#allocation2 + $0x68] sm:$0xff]
        %v1796 = vld [vmem:[#allocation2 + $0x70] sm:$0xff]
        %v1797 = vld [vmem:[#allocation2 + $0x78] sm:$0xff]
        %v1798 = vld [vmem:[#allocation2 + $0x80] sm:$0xff]
        %v1799 = vld [vmem:[#allocation2 + $0x88] sm:$0xff]
        %v1800 = vld [vmem:[#allocation2 + $0x90] sm:$0xff]
        %v1801 = vld [vmem:[#allocation2 + $0x98] sm:$0xff]
        %v1802 = vld [vmem:[#allocation2 + $0xa0] sm:$0xff]
        %v1803 = vld [vmem:[#allocation2 + $0xa8] sm:$0xff]
        %v1804 = vld [vmem:[#allocation2 + $0xb0] sm:$0xff]
        %v1805 = vld [vmem:[#allocation2 + $0xb8] sm:$0xff]
        %v1806 = vld [vmem:[#allocation2 + $0xc0] sm:$0xff]
        %v1807 = vld [vmem:[#allocation2 + $0xc8] sm:$0xff]
        %v1808 = vld [vmem:[#allocation2 + $0xd0] sm:$0xff]
        %v1809 = vld [vmem:[#allocation2 + $0xd8] sm:$0xff]
        %v1810 = vld [vmem:[#allocation2 + $0xe0] sm:$0xff]
        %v1811 = vld [vmem:[#allocation2 + $0xe8] sm:$0xff]
        %v1812 = vld [vmem:[#allocation2 + $0xf0] sm:$0xff]
        %v1813 = vld [vmem:[#allocation2 + $0xf8] sm:$0xff]
        %v1814 = vld [vmem:[%s2] sm:$0xff]
        %v1815 = vld [vmem:[%s2 + $0x8] sm:$0xff]
        %1817 = vset.pattern.permute.xlu0 0
        %1818 = vperm.xlu0 %1817, %v1814
        %v1819 = vpop.permute.xlu0 %1818
        %1822 = vset.pattern.permute.xlu0 0
        %1823 = vperm.xlu0 %1822, %v1815
        %v1824 = vpop.permute.xlu0 %1823
        %vm1826 = vcmask 293888
        %v1828 = vsel %vm1826, %v1780, 0
        %v1831 = vsel %vm1826, %v1781, 0
        %v1834 = vsel %vm1826, %v1782, 0
        %v1837 = vsel %vm1826, %v1783, 0
        %v1840 = vsel %vm1826, %v1784, 0
        %v1843 = vsel %vm1826, %v1785, 0
        %v1846 = vsel %vm1826, %v1786, 0
        %v1849 = vsel %vm1826, %v1787, 0
        %v1852 = vsel %vm1826, %v1788, 0
        %v1855 = vsel %vm1826, %v1789, 0
        %v1858 = vsel %vm1826, %v1790, 0
        %v1861 = vsel %vm1826, %v1791, 0
        %v1864 = vsel %vm1826, %v1792, 0
        %v1867 = vsel %vm1826, %v1793, 0
        %v1870 = vsel %vm1826, %v1794, 0
        %v1873 = vsel %vm1826, %v1795, 0
        %v1876 = vsel %vm1826, %v1796, 0
        %v1879 = vsel %vm1826, %v1797, 0
        %v1882 = vsel %vm1826, %v1798, 0
        %v1885 = vsel %vm1826, %v1799, 0
        %v1888 = vsel %vm1826, %v1800, 0
        %v1891 = vsel %vm1826, %v1801, 0
        %v1894 = vsel %vm1826, %v1802, 0
        %v1897 = vsel %vm1826, %v1803, 0
        %v1900 = vsel %vm1826, %v1804, 0
        %v1903 = vsel %vm1826, %v1805, 0
        %v1906 = vsel %vm1826, %v1806, 0
        %v1909 = vsel %vm1826, %v1807, 0
        %v1912 = vsel %vm1826, %v1808, 0
        %v1915 = vsel %vm1826, %v1809, 0
        %v1918 = vsel %vm1826, %v1810, 0
        %v1921 = vsel %vm1826, %v1811, 0
        %v1924 = vsel %vm1826, %v1812, 0
        %v1927 = vsel %vm1826, %v1813, 0
        %1929 = vmatprep.subr.mxu0 0.0
        %1930 = vmatpush1.xpose.msra.mxu0 %v1834
        %1931 = vmatprep.subr.mxu0 0.0
        %1932 = vmatpush1.xpose.msra.mxu0 %v1837
        %1933 = vmatprep.subr.mxu0 0.0
        %1934 = vmatpush1.xpose.msra.mxu0 %v1840
        %1935 = vmatprep.subr.mxu0 0.0
        %1936 = vmatpush1.xpose.msra.mxu0 %v1843
        %1937 = vmatprep.subr.mxu0 0.0
        %1938 = vmatpush1.xpose.msra.mxu0 %v1846
        %1939 = vmatprep.subr.mxu0 0.0
        %1940 = vmatpush1.xpose.msra.mxu0 %v1849
        %1941 = vmatprep.subr.mxu0 0.0
        %1942 = vmatpush1.xpose.msra.mxu0 %v1852
        %1943 = vmatprep.subr.mxu0 0.0
        %1944 = vmatpush1.xpose.msra.mxu0 %v1855
        %1945 = vmatprep.subr.mxu0 0.0
        %1946 = vmatpush1.xpose.msra.mxu0 %v1858
        %1947 = vmatprep.subr.mxu0 0.0
        %1948 = vmatpush1.xpose.msra.mxu0 %v1861
        %1949 = vmatprep.subr.mxu0 0.0
        %1950 = vmatpush1.xpose.msra.mxu0 %v1864
        %1951 = vmatprep.subr.mxu0 0.0
        %1952 = vmatpush1.xpose.msra.mxu0 %v1867
        %1953 = vmatprep.subr.mxu0 0.0
        %1954 = vmatpush1.xpose.msra.mxu0 %v1870
        %1955 = vmatprep.subr.mxu0 0.0
        %1956 = vmatpush1.xpose.msra.mxu0 %v1873
        %1957 = vmatprep.subr.mxu0 0.0
        %1958 = vmatpush1.xpose.msra.mxu0 %v1876
        %1959 = vmatprep.subr.mxu0 0.0
        %1960 = vmatpush1.xpose.msra.mxu0 %v1879
        %1961 = vmatprep.subr.mxu0 0.0
        %1962 = vmatpush1.xpose.msra.mxu0 %v1882
        %1963 = vmatprep.subr.mxu0 0.0
        %1964 = vmatpush1.xpose.msra.mxu0 %v1885
        %1965 = vmatprep.subr.mxu0 0.0
        %1966 = vmatpush1.xpose.msra.mxu0 %v1888
        %1967 = vmatprep.subr.mxu0 0.0
        %1968 = vmatpush1.xpose.msra.mxu0 %v1891
        %1969 = vmatprep.subr.mxu0 0.0
        %1970 = vmatpush1.xpose.msra.mxu0 %v1894
        %1971 = vmatprep.subr.mxu0 0.0
        %1972 = vmatpush1.xpose.msra.mxu0 %v1897
        %1973 = vmatprep.subr.mxu0 0.0
        %1974 = vmatpush1.xpose.msra.mxu0 %v1900
        %1975 = vmatprep.subr.mxu0 0.0
        %1976 = vmatpush1.xpose.msra.mxu0 %v1903
        %1977 = vmatprep.subr.mxu0 0.0
        %1978 = vmatpush1.xpose.msra.mxu0 %v1906
        %1979 = vmatprep.subr.mxu0 0.0
        %1980 = vmatpush1.xpose.msra.mxu0 %v1909
        %1981 = vmatprep.subr.mxu0 0.0
        %1982 = vmatpush1.xpose.msra.mxu0 %v1912
        %1983 = vmatprep.subr.mxu0 0.0
        %1984 = vmatpush1.xpose.msra.mxu0 %v1915
        %1985 = vmatprep.subr.mxu0 0.0
        %1986 = vmatpush1.xpose.msra.mxu0 %v1918
        %1987 = vmatprep.subr.mxu0 0.0
        %1988 = vmatpush1.xpose.msra.mxu0 %v1921
        %1989 = vmatprep.subr.mxu0 0.0
        %1990 = vmatpush1.xpose.msra.mxu0 %v1924
        %1991 = vmatprep.subr.mxu0 0.0
        %1992 = vmatpush1.xpose.msra.mxu0 %v1927
        %1993 = vmatprep.mubr.f32.mxu0 0.0
        %1994 = vmatmul.mubr.f32.gmra.mrb[0].mxu0 %v1828
        %v1995 = vpop.f32.mrb[0].mxu0
        %v1996 = vadd.f32 %v1819, %v1995
        %v1997 = vpop.f32.mrb[0].mxu0
        %v1998 = vadd.f32 %v1819, %v1997
        %1999 = vmatprep.mubr.f32.mxu0 0.0
        %2000 = vmatmul.mubr.f32.gmra.mrb[0].mxu0 %v1831
        %v2001 = vpop.f32.mrb[0].mxu0
        %v2002 = vadd.f32 %v1824, %v2001
        %v2003 = vpop.f32.mrb[0].mxu0
        %v2004 = vadd.f32 %v1824, %v2003
        %2005 = vdwg.mxu0
        %v2006 = vmax.f32 %v1996, 0.0
        %v2007 = vmax.f32 %v1998, 0.0
        %v2008 = vmax.f32 %v2002, 0.0
        %v2009 = vmax.f32 %v2004, 0.0
        %2010 = vst [vmem:[%s163] sm:$0xff] %v2006
        %2011 = vst [vmem:[%s163 + $0x8] sm:$0xff] %v2007
        %2012 = vst [vmem:[%s163 + $0x10] sm:$0xff] %v2008
        %2013 = vst [vmem:[%s163 + $0x18] sm:$0xff] %v2009
        %s2014 = sand.u32 %s93, 1
        %s2015 = scalar_lea.sflag [#allocation4], %s2014
        %s2016 = sand.u32 %s93, 1
        %s2017 = smul.addr %s2016, 32
        %s2018 = scalar_lea.vmem [#allocation3], %s2017
        // Predicated region
        $region33: #{tpu_custom_call.1} parent=31 // pred_check
          %p2019 = pneg %p103
        $region34: #{tpu_custom_call.1} parent=31 // pred_check_branch
          %2021 = sbr.rel (%p2019) target = $region36
        $region35: #{tpu_custom_call.1} parent=31 // pred_region
          %s2023 = ssub.s32 512, 512
          %2024 = vsyncadd %s2015, %s2023
          %s2025 = smul.addr %s17, 4
          %s2026 = smul.addr %s2025, 128
          %s2027 = scalar_lea.hbm %s3, %s2026
          %s2028 = sshll.u32 %s2018, 4
          %s2029 = int_to_ptr.vmem [resolvable:$true] %s2028
          %2034 = dma.vmem_to_hbm [thread:$0]  %s2029, 512, %s2027, %s2015, 256, 256, 16
        $region36: #{tpu_custom_call.1} parent=31 // pred_fallthru
          _
      $region32: #{tpu_custom_call.1} parent=5 // pred_fallthru
        _
      %p2035 = scmp.le.s32.totalorder 2, %s12
      // Predicated region
      $region37: #{tpu_custom_call.1} parent=5 // pred_check
        %p2036 = pneg %p2035
      $region38: #{tpu_custom_call.1} parent=5 // pred_check_branch
        %2038 = sbr.rel (%p2036) target = $region40
      $region39: #{tpu_custom_call.1} parent=5 // pred_region
        %s2039 = ssub.s32 %s12, 2
        // Predicated region
        $region41: #{tpu_custom_call.1} parent=39 // pred_check
          %p2040 = pneg %p109
        $region42: #{tpu_custom_call.1} parent=39 // pred_check_branch
          %2042 = sbr.rel (%p2040) target = $region44
        $region43: #{tpu_custom_call.1} parent=39 // pred_region
          %s2043 = sand.u32 %s94, 1
          %s2044 = scalar_lea.sflag [#allocation4], %s2043
          %s2045 = sand.u32 %s94, 1
          %s2046 = smul.addr %s2045, 32
          %s2047 = scalar_lea.vmem [#allocation3], %s2046
          %2048 = dma.done %s2044, 512
        $region44: #{tpu_custom_call.1} parent=39 // pred_fallthru
          _
      $region40: #{tpu_custom_call.1} parent=5 // pred_fallthru
        _
    $region6: #{tpu_custom_call.1} parent=1 // loop_footer
      %s16 = sadd.s32 1, %s12
    $region7: #{tpu_custom_call.1} parent=1 // loop_footer_branch
      %11 = sbr.rel target = $region3
    $region8: #{tpu_custom_call.1} parent=1 // loop_exit
      _
    %2049 = vsyncpa [#allocation4], 1
    %s2050 = scalar_lea.sflag [#allocation4], 1
    %2051 = vsyncpa %s2050, 1

</llo_original>
